<compile_context>
chip_gen: v6e
topology: v6e:2x2x1
jax: 0.10.0
libtpu: 0.0.40
codegen_flags: <defaults>
</compile_context>

<pallas_src>
import jax
import jax.numpy as jnp
from jax.experimental import pallas as pl
from jax.experimental.pallas import tpu as pltpu


def _gru_ctx_kernel(pacts_ref, prews_ref, pxs_ref,
                    w_act_ref, w_rew_ref, w_obs_ref, bias_ref,
                    whh_r_ref, whh_z_ref, whh_n_ref, b_hn_ref,
                    out_ref):
    """Fused concat + input projection + unidirectional GRU, final hidden state.

    pacts_ref: (B, T*A) f32   previous actions, batch-major flat
    prews_ref: (B, T)   f32   previous rewards
    pxs_ref:   (B, T*O) f32   previous observations
    w_act_ref: (A, 3H) bf16   input->gates weights, action columns   (PyTorch r,z,n order)
    w_rew_ref: (1, 3H) f32    input->gates weights, reward column    (VPU broadcast-mul)
    w_obs_ref: (O, 3H) bf16   input->gates weights, observation cols
    bias_ref:  (1, 3H) f32    b_ih + [b_hr, b_hz, 0]   (b_hr / b_hz folded in)
    whh_*_ref: (H, H)  bf16   hidden->gate weights, one block per gate (lane 0 aligned)
    b_hn_ref:  (1, H)  f32    hidden bias of the n gate (must stay inside r * (...))
    out_ref:   (B, H)  f32    final hidden state
    """
    B = pacts_ref.shape[0]
    T = prews_ref.shape[1]
    A = pacts_ref.shape[1] // T
    O = pxs_ref.shape[1] // T
    H = whh_r_ref.shape[0]

    w_act = w_act_ref[...]           # (A, 3H) bf16
    w_obs = w_obs_ref[...]           # (O, 3H) bf16
    w_rew = w_rew_ref[...]           # (1, 3H) f32
    bias = bias_ref[...]             # (1, 3H) f32

    # ---- Prologue (off the serial chain): per-timestep, per-gate input projections. ----
    # T is a small static int -> plain Python lists of (B, H) f32 arrays, no big tensor,
    # no dynamic indexing, no per-step sublane gathers in the recurrence.
    gi_r, gi_z, gi_n = [], [], []
    for t in range(T):
        a_t = pacts_ref[:, t * A:(t + 1) * A].astype(jnp.bfloat16)    # (B, A)
        o_t = pxs_ref[:, t * O:(t + 1) * O].astype(jnp.bfloat16)      # (B, O)
        r_t = prews_ref[:, t:t + 1]                                   # (B, 1) f32
        gi_t = (jnp.dot(a_t, w_act, preferred_element_type=jnp.float32)
                + jnp.dot(o_t, w_obs, preferred_element_type=jnp.float32)
                + r_t * w_rew + bias)                                 # (B, 3H) f32
        gi_r.append(gi_t[:, 0:H])
        gi_z.append(gi_t[:, H:2 * H])
        gi_n.append(gi_t[:, 2 * H:3 * H])

    whh_r = whh_r_ref[...]           # (H, H) bf16
    whh_z = whh_z_ref[...]
    whh_n = whh_n_ref[...]
    b_hn = jnp.broadcast_to(b_hn_ref[...], (B, H))   # hoisted broadcast (not re-done per step)

    # ---- Recurrence. t = 0: h0 == 0 -> gh_* == 0 and z*h0 == 0; skip the matmuls. ----
    r0 = jax.nn.sigmoid(gi_r[0])
    z0 = jax.nn.sigmoid(gi_z[0])
    n0 = jnp.tanh(gi_n[0] + r0 * b_hn)
    h = (1.0 - z0) * n0                                               # (B, H) f32

    # Serial critical path per step: 3 tiny bf16 MXU pushes (each gate lane-0 aligned,
    # no lane relayout) + EUP sigmoid/sigmoid/tanh + a handful of f32 VPU ops.
    for t in range(1, T):
        h_bf = h.astype(jnp.bfloat16)
        gh_r = jnp.dot(h_bf, whh_r, preferred_element_type=jnp.float32)
        gh_z = jnp.dot(h_bf, whh_z, preferred_element_type=jnp.float32)
        gh_n = jnp.dot(h_bf, whh_n, preferred_element_type=jnp.float32)
        r = jax.nn.sigmoid(gi_r[t] + gh_r)
        z = jax.nn.sigmoid(gi_z[t] + gh_z)
        n = jnp.tanh(gi_n[t] + r * (gh_n + b_hn))
        h = (1.0 - z) * n + z * h

    out_ref[...] = h.astype(out_ref.dtype)


def gru_context_pallas(previous_action, previous_reward, pre_x,
                       w_act, w_rew, w_obs, bias_all, whh_r, whh_z, whh_n, b_hn):
    """Raw 2-D inputs go straight to the kernel (no wrapper-side reshape/concat/transpose)."""
    B = previous_action.shape[0]
    T = previous_reward.shape[1]
    H = whh_r.shape[0]
    assert T >= 1, "history_length must be >= 1"

    vmem = pltpu.MemorySpace.VMEM
    return pl.pallas_call(
        _gru_ctx_kernel,
        out_shape=jax.ShapeDtypeStruct((B, H), jnp.float32),
        in_specs=[pl.BlockSpec(memory_space=vmem)] * 11,   # everything resident in VMEM
        out_specs=pl.BlockSpec(memory_space=vmem),
    )(previous_action, previous_reward, pre_x,
      w_act, w_rew, w_obs, bias_all, whh_r, whh_z, whh_n, b_hn)


class ContextPallas:
    """JAX/Pallas port of Context with only_concat_context=3 (GRU context encoder)."""

    def __init__(self, hidden_sizes, input_dim, action_dim, obsr_dim, history_length, key):
        self.hidden = hidden_sizes[0]
        self.input_dim = input_dim
        self.action_dim = action_dim
        self.obsr_dim = obsr_dim
        self.hist_length = history_length
        assert input_dim == action_dim + 1 + obsr_dim

        H, D, A, O = self.hidden, self.input_dim, self.action_dim, self.obsr_dim
        bound = 1.0 / float(H) ** 0.5
        k1, k2, k3, k4 = jax.random.split(key, 4)
        # Deterministic init mimicking nn.GRU's uniform(-1/sqrt(H), 1/sqrt(H)), PyTorch layout.
        self.w_ih = jax.random.uniform(k1, (3 * H, D), jnp.float32, -bound, bound)
        self.w_hh = jax.random.uniform(k2, (3 * H, H), jnp.float32, -bound, bound)
        self.b_ih = jax.random.uniform(k3, (3 * H,), jnp.float32, -bound, bound)
        self.b_hh = jax.random.uniform(k4, (3 * H,), jnp.float32, -bound, bound)

        # ---- Kernel-layout parameters, precomputed ONCE. ----
        # Input->gate weights split by input stream (action / reward / obs columns of x),
        # transposed for x @ W, MXU operands pre-cast to bf16.
        self.w_act = jnp.asarray(self.w_ih[:, 0:A].T, jnp.bfloat16)              # (A, 3H)
        self.w_rew = jnp.asarray(self.w_ih[:, A:A + 1].T, jnp.float32)           # (1, 3H)
        self.w_obs = jnp.asarray(self.w_ih[:, A + 1:D].T, jnp.bfloat16)          # (O, 3H)
        # Hidden->gate weights split per gate (each gate lane-0 aligned in its own matmul).
        self.whh_r = jnp.asarray(self.w_hh[0:H, :].T, jnp.bfloat16)              # (H, H)
        self.whh_z = jnp.asarray(self.w_hh[H:2 * H, :].T, jnp.bfloat16)          # (H, H)
        self.whh_n = jnp.asarray(self.w_hh[2 * H:3 * H, :].T, jnp.bfloat16)      # (H, H)
        # b_hr, b_hz folded into the precomputed gates; only b_hn stays in the recurrence.
        folded = self.b_ih + jnp.concatenate(
            [self.b_hh[0:2 * H], jnp.zeros((H,), jnp.float32)])
        self.bias_all = folded.reshape(1, 3 * H)                                 # (1, 3H)
        self.b_hn = self.b_hh[2 * H:3 * H].reshape(1, H)                         # (1, H)

    def __call__(self, data):
        previous_action, previous_reward, pre_x = data[0], data[1], data[2]
        # No reshape/concat here: the kernel consumes the raw flat (B, T*A)/(B, T)/(B, T*O)
        # tensors directly and fuses the concat + input projection.
        return gru_context_pallas(previous_action, previous_reward, pre_x,
                                  self.w_act, self.w_rew, self.w_obs, self.bias_all,
                                  self.whh_r, self.whh_z, self.whh_n, self.b_hn)


def _gru_reference(x_tbd, w_ih, w_hh, b_ih, b_hh):
    """Pure-JAX f32 reference (PyTorch GRU equations, PyTorch weight layout)."""
    H = w_hh.shape[1]
    B = x_tbd.shape[1]

    def step(h, x):
        gi = x @ w_ih.T + b_ih
        gh = h @ w_hh.T + b_hh
        i_r, i_z, i_n = gi[:, :H], gi[:, H:2 * H], gi[:, 2 * H:]
        h_r, h_z, h_n = gh[:, :H], gh[:, H:2 * H], gh[:, 2 * H:]
        r = jax.nn.sigmoid(i_r + h_r)
        z = jax.nn.sigmoid(i_z + h_z)
        n = jnp.tanh(i_n + r * h_n)
        h_new = (1.0 - z) * n + z * h
        return h_new, None

    h0 = jnp.zeros((B, H), jnp.float32)
    h_final, _ = jax.lax.scan(step, h0, x_tbd)
    return h_final


if __name__ == "__main__":
    # Small shapes consistent with the module's forward:
    B = 8              # batch size
    T = 4              # history_length
    A = 6              # action_dim
    O = 17             # obsr_dim
    D = A + 1 + O      # input_dim = 24
    H = 32             # hidden_sizes[0]

    key = jax.random.PRNGKey(0)
    k_params, k_a, k_r, k_x = jax.random.split(key, 4)

    model = ContextPallas(hidden_sizes=[H], input_dim=D, action_dim=A,
                          obsr_dim=O, history_length=T, key=k_params)

    previous_action = jax.random.normal(k_a, (B, T * A), jnp.float32)
    previous_reward = jax.random.normal(k_r, (B, T * 1), jnp.float32)
    pre_x = jax.random.normal(k_x, (B, T * O), jnp.float32)

    out = model((previous_action, previous_reward, pre_x))
    out = jax.block_until_ready(out)

    # Verify against the pure-JAX f32 GRU reference (kernel uses bf16 MXU operands with
    # f32 accumulation, so use a slightly looser tolerance).
    pacts = previous_action.reshape(B, T, A)
    prews = previous_reward.reshape(B, T, 1)
    pxs = pre_x.reshape(B, T, O)
    x_tbd = jnp.transpose(jnp.concatenate([pacts, prews, pxs], axis=-1), (1, 0, 2))
    ref = _gru_reference(x_tbd, model.w_ih, model.w_hh, model.b_ih, model.b_hh)

    assert out.shape == (B, H), out.shape
    err = float(jnp.max(jnp.abs(out - ref)))
    assert jnp.allclose(out, ref, atol=2e-2, rtol=2e-2), err

    print("KERNEL_OK")
</pallas_src>

<mosaic_0001>
module attributes {stable_mosaic.version = 11 : i64} {
  func.func @_gru_ctx_kernel(%arg0: memref<8x24xf32, #tpu.memory_space<vmem>>, %arg1: memref<8x4xf32, #tpu.memory_space<vmem>>, %arg2: memref<8x68xf32, #tpu.memory_space<vmem>>, %arg3: memref<6x96xbf16, #tpu.memory_space<vmem>>, %arg4: memref<1x96xf32, #tpu.memory_space<vmem>>, %arg5: memref<17x96xbf16, #tpu.memory_space<vmem>>, %arg6: memref<1x96xf32, #tpu.memory_space<vmem>>, %arg7: memref<32x32xbf16, #tpu.memory_space<vmem>>, %arg8: memref<32x32xbf16, #tpu.memory_space<vmem>>, %arg9: memref<32x32xbf16, #tpu.memory_space<vmem>>, %arg10: memref<1x32xf32, #tpu.memory_space<vmem>>, %arg11: memref<8x32xf32, #tpu.memory_space<vmem>>) attributes {dimension_semantics = [], scalar_prefetch = 0 : i64, scratch_operands = 0 : i64, tpu.core_type = #tpu.core_type<tc>} {
    %c0 = arith.constant 0 : index
    %c0_0 = arith.constant 0 : index
    %0 = vector.load %arg3[%c0, %c0_0] : memref<6x96xbf16, #tpu.memory_space<vmem>>, vector<6x96xbf16>
    %c0_1 = arith.constant 0 : index
    %c0_2 = arith.constant 0 : index
    %1 = vector.load %arg5[%c0_1, %c0_2] : memref<17x96xbf16, #tpu.memory_space<vmem>>, vector<17x96xbf16>
    %c0_3 = arith.constant 0 : index
    %c0_4 = arith.constant 0 : index
    %2 = vector.load %arg4[%c0_3, %c0_4] : memref<1x96xf32, #tpu.memory_space<vmem>>, vector<1x96xf32>
    %c0_5 = arith.constant 0 : index
    %c0_6 = arith.constant 0 : index
    %3 = vector.load %arg6[%c0_5, %c0_6] : memref<1x96xf32, #tpu.memory_space<vmem>>, vector<1x96xf32>
    %c0_7 = arith.constant 0 : index
    %c0_8 = arith.constant 0 : index
    %4 = vector.load %arg0[%c0_7, %c0_8] : memref<8x24xf32, #tpu.memory_space<vmem>>, vector<8x6xf32>
    %5 = arith.truncf %4 : vector<8x6xf32> to vector<8x6xbf16>
    %c0_9 = arith.constant 0 : index
    %c0_10 = arith.constant 0 : index
    %6 = vector.load %arg2[%c0_9, %c0_10] : memref<8x68xf32, #tpu.memory_space<vmem>>, vector<8x17xf32>
    %7 = arith.truncf %6 : vector<8x17xf32> to vector<8x17xbf16>
    %c0_11 = arith.constant 0 : index
    %c0_12 = arith.constant 0 : index
    %8 = vector.load %arg1[%c0_11, %c0_12] : memref<8x4xf32, #tpu.memory_space<vmem>>, vector<8x1xf32>
    %cst = arith.constant dense<0.000000e+00> : vector<8x96xf32>
    %9 = tpu.matmul %5, %0, %cst {dimension_numbers = #tpu.dot_dimension_numbers<[1], [0], [0], [1], [0, 0, 1, 1], [], []>} : vector<8x6xbf16>, vector<6x96xbf16>, vector<8x96xf32> -> vector<8x96xf32>
    %cst_13 = arith.constant dense<0.000000e+00> : vector<8x96xf32>
    %10 = tpu.matmul %7, %1, %cst_13 {dimension_numbers = #tpu.dot_dimension_numbers<[1], [0], [0], [1], [0, 0, 1, 1], [], []>} : vector<8x17xbf16>, vector<17x96xbf16>, vector<8x96xf32> -> vector<8x96xf32>
    %11 = arith.addf %9, %10 : vector<8x96xf32>
    %12 = vector.broadcast %8 : vector<8x1xf32> to vector<8x96xf32>
    %13 = vector.broadcast %2 : vector<1x96xf32> to vector<8x96xf32>
    %14 = arith.mulf %12, %13 : vector<8x96xf32>
    %15 = arith.addf %11, %14 : vector<8x96xf32>
    %16 = vector.broadcast %3 : vector<1x96xf32> to vector<8x96xf32>
    %17 = arith.addf %15, %16 : vector<8x96xf32>
    %18 = vector.extract_strided_slice %17 {offsets = [0, 0], sizes = [8, 32], strides = [1, 1]} : vector<8x96xf32> to vector<8x32xf32>
    %19 = vector.extract_strided_slice %17 {offsets = [0, 32], sizes = [8, 32], strides = [1, 1]} : vector<8x96xf32> to vector<8x32xf32>
    %20 = vector.extract_strided_slice %17 {offsets = [0, 64], sizes = [8, 32], strides = [1, 1]} : vector<8x96xf32> to vector<8x32xf32>
    %c0_14 = arith.constant 0 : index
    %c6 = arith.constant 6 : index
    %21 = vector.load %arg0[%c0_14, %c6] : memref<8x24xf32, #tpu.memory_space<vmem>>, vector<8x6xf32>
    %22 = arith.truncf %21 : vector<8x6xf32> to vector<8x6xbf16>
    %c0_15 = arith.constant 0 : index
    %c17 = arith.constant 17 : index
    %23 = vector.load %arg2[%c0_15, %c17] : memref<8x68xf32, #tpu.memory_space<vmem>>, vector<8x17xf32>
    %24 = arith.truncf %23 : vector<8x17xf32> to vector<8x17xbf16>
    %c0_16 = arith.constant 0 : index
    %c1 = arith.constant 1 : index
    %25 = vector.load %arg1[%c0_16, %c1] : memref<8x4xf32, #tpu.memory_space<vmem>>, vector<8x1xf32>
    %cst_17 = arith.constant dense<0.000000e+00> : vector<8x96xf32>
    %26 = tpu.matmul %22, %0, %cst_17 {dimension_numbers = #tpu.dot_dimension_numbers<[1], [0], [0], [1], [0, 0, 1, 1], [], []>} : vector<8x6xbf16>, vector<6x96xbf16>, vector<8x96xf32> -> vector<8x96xf32>
    %cst_18 = arith.constant dense<0.000000e+00> : vector<8x96xf32>
    %27 = tpu.matmul %24, %1, %cst_18 {dimension_numbers = #tpu.dot_dimension_numbers<[1], [0], [0], [1], [0, 0, 1, 1], [], []>} : vector<8x17xbf16>, vector<17x96xbf16>, vector<8x96xf32> -> vector<8x96xf32>
    %28 = arith.addf %26, %27 : vector<8x96xf32>
    %29 = vector.broadcast %25 : vector<8x1xf32> to vector<8x96xf32>
    %30 = vector.broadcast %2 : vector<1x96xf32> to vector<8x96xf32>
    %31 = arith.mulf %29, %30 : vector<8x96xf32>
    %32 = arith.addf %28, %31 : vector<8x96xf32>
    %33 = vector.broadcast %3 : vector<1x96xf32> to vector<8x96xf32>
    %34 = arith.addf %32, %33 : vector<8x96xf32>
    %35 = vector.extract_strided_slice %34 {offsets = [0, 0], sizes = [8, 32], strides = [1, 1]} : vector<8x96xf32> to vector<8x32xf32>
    %36 = vector.extract_strided_slice %34 {offsets = [0, 32], sizes = [8, 32], strides = [1, 1]} : vector<8x96xf32> to vector<8x32xf32>
    %37 = vector.extract_strided_slice %34 {offsets = [0, 64], sizes = [8, 32], strides = [1, 1]} : vector<8x96xf32> to vector<8x32xf32>
    %c0_19 = arith.constant 0 : index
    %c12 = arith.constant 12 : index
    %38 = vector.load %arg0[%c0_19, %c12] : memref<8x24xf32, #tpu.memory_space<vmem>>, vector<8x6xf32>
    %39 = arith.truncf %38 : vector<8x6xf32> to vector<8x6xbf16>
    %c0_20 = arith.constant 0 : index
    %c34 = arith.constant 34 : index
    %40 = vector.load %arg2[%c0_20, %c34] : memref<8x68xf32, #tpu.memory_space<vmem>>, vector<8x17xf32>
    %41 = arith.truncf %40 : vector<8x17xf32> to vector<8x17xbf16>
    %c0_21 = arith.constant 0 : index
    %c2 = arith.constant 2 : index
    %42 = vector.load %arg1[%c0_21, %c2] : memref<8x4xf32, #tpu.memory_space<vmem>>, vector<8x1xf32>
    %cst_22 = arith.constant dense<0.000000e+00> : vector<8x96xf32>
    %43 = tpu.matmul %39, %0, %cst_22 {dimension_numbers = #tpu.dot_dimension_numbers<[1], [0], [0], [1], [0, 0, 1, 1], [], []>} : vector<8x6xbf16>, vector<6x96xbf16>, vector<8x96xf32> -> vector<8x96xf32>
    %cst_23 = arith.constant dense<0.000000e+00> : vector<8x96xf32>
    %44 = tpu.matmul %41, %1, %cst_23 {dimension_numbers = #tpu.dot_dimension_numbers<[1], [0], [0], [1], [0, 0, 1, 1], [], []>} : vector<8x17xbf16>, vector<17x96xbf16>, vector<8x96xf32> -> vector<8x96xf32>
    %45 = arith.addf %43, %44 : vector<8x96xf32>
    %46 = vector.broadcast %42 : vector<8x1xf32> to vector<8x96xf32>
    %47 = vector.broadcast %2 : vector<1x96xf32> to vector<8x96xf32>
    %48 = arith.mulf %46, %47 : vector<8x96xf32>
    %49 = arith.addf %45, %48 : vector<8x96xf32>
    %50 = vector.broadcast %3 : vector<1x96xf32> to vector<8x96xf32>
    %51 = arith.addf %49, %50 : vector<8x96xf32>
    %52 = vector.extract_strided_slice %51 {offsets = [0, 0], sizes = [8, 32], strides = [1, 1]} : vector<8x96xf32> to vector<8x32xf32>
    %53 = vector.extract_strided_slice %51 {offsets = [0, 32], sizes = [8, 32], strides = [1, 1]} : vector<8x96xf32> to vector<8x32xf32>
    %54 = vector.extract_strided_slice %51 {offsets = [0, 64], sizes = [8, 32], strides = [1, 1]} : vector<8x96xf32> to vector<8x32xf32>
    %c0_24 = arith.constant 0 : index
    %c18 = arith.constant 18 : index
    %55 = vector.load %arg0[%c0_24, %c18] : memref<8x24xf32, #tpu.memory_space<vmem>>, vector<8x6xf32>
    %56 = arith.truncf %55 : vector<8x6xf32> to vector<8x6xbf16>
    %c0_25 = arith.constant 0 : index
    %c51 = arith.constant 51 : index
    %57 = vector.load %arg2[%c0_25, %c51] : memref<8x68xf32, #tpu.memory_space<vmem>>, vector<8x17xf32>
    %58 = arith.truncf %57 : vector<8x17xf32> to vector<8x17xbf16>
    %c0_26 = arith.constant 0 : index
    %c3 = arith.constant 3 : index
    %59 = vector.load %arg1[%c0_26, %c3] : memref<8x4xf32, #tpu.memory_space<vmem>>, vector<8x1xf32>
    %cst_27 = arith.constant dense<0.000000e+00> : vector<8x96xf32>
    %60 = tpu.matmul %56, %0, %cst_27 {dimension_numbers = #tpu.dot_dimension_numbers<[1], [0], [0], [1], [0, 0, 1, 1], [], []>} : vector<8x6xbf16>, vector<6x96xbf16>, vector<8x96xf32> -> vector<8x96xf32>
    %cst_28 = arith.constant dense<0.000000e+00> : vector<8x96xf32>
    %61 = tpu.matmul %58, %1, %cst_28 {dimension_numbers = #tpu.dot_dimension_numbers<[1], [0], [0], [1], [0, 0, 1, 1], [], []>} : vector<8x17xbf16>, vector<17x96xbf16>, vector<8x96xf32> -> vector<8x96xf32>
    %62 = arith.addf %60, %61 : vector<8x96xf32>
    %63 = vector.broadcast %59 : vector<8x1xf32> to vector<8x96xf32>
    %64 = vector.broadcast %2 : vector<1x96xf32> to vector<8x96xf32>
    %65 = arith.mulf %63, %64 : vector<8x96xf32>
    %66 = arith.addf %62, %65 : vector<8x96xf32>
    %67 = vector.broadcast %3 : vector<1x96xf32> to vector<8x96xf32>
    %68 = arith.addf %66, %67 : vector<8x96xf32>
    %69 = vector.extract_strided_slice %68 {offsets = [0, 0], sizes = [8, 32], strides = [1, 1]} : vector<8x96xf32> to vector<8x32xf32>
    %70 = vector.extract_strided_slice %68 {offsets = [0, 32], sizes = [8, 32], strides = [1, 1]} : vector<8x96xf32> to vector<8x32xf32>
    %71 = vector.extract_strided_slice %68 {offsets = [0, 64], sizes = [8, 32], strides = [1, 1]} : vector<8x96xf32> to vector<8x32xf32>
    %c0_29 = arith.constant 0 : index
    %c0_30 = arith.constant 0 : index
    %72 = vector.load %arg7[%c0_29, %c0_30] : memref<32x32xbf16, #tpu.memory_space<vmem>>, vector<32x32xbf16>
    %c0_31 = arith.constant 0 : index
    %c0_32 = arith.constant 0 : index
    %73 = vector.load %arg8[%c0_31, %c0_32] : memref<32x32xbf16, #tpu.memory_space<vmem>>, vector<32x32xbf16>
    %c0_33 = arith.constant 0 : index
    %c0_34 = arith.constant 0 : index
    %74 = vector.load %arg9[%c0_33, %c0_34] : memref<32x32xbf16, #tpu.memory_space<vmem>>, vector<32x32xbf16>
    %c0_35 = arith.constant 0 : index
    %c0_36 = arith.constant 0 : index
    %75 = vector.load %arg10[%c0_35, %c0_36] : memref<1x32xf32, #tpu.memory_space<vmem>>, vector<1x32xf32>
    %76 = vector.shape_cast %75 : vector<1x32xf32> to vector<1x32xf32>
    %77 = vector.broadcast %76 : vector<1x32xf32> to vector<8x32xf32>
    %78 = arith.negf %18 : vector<8x32xf32>
    %79 = math.exp %78 : vector<8x32xf32>
    %cst_37 = arith.constant 1.000000e+00 : f32
    %80 = vector.broadcast %cst_37 : f32 to vector<8x32xf32>
    %81 = arith.addf %80, %79 : vector<8x32xf32>
    %82 = arith.divf %80, %81 : vector<8x32xf32>
    %83 = arith.negf %19 : vector<8x32xf32>
    %84 = math.exp %83 : vector<8x32xf32>
    %cst_38 = arith.constant 1.000000e+00 : f32
    %85 = vector.broadcast %cst_38 : f32 to vector<8x32xf32>
    %86 = arith.addf %85, %84 : vector<8x32xf32>
    %87 = arith.divf %85, %86 : vector<8x32xf32>
    %88 = arith.mulf %82, %77 : vector<8x32xf32>
    %89 = arith.addf %20, %88 : vector<8x32xf32>
    %90 = math.tanh %89 : vector<8x32xf32>
    %cst_39 = arith.constant 1.000000e+00 : f32
    %91 = vector.broadcast %cst_39 : f32 to vector<8x32xf32>
    %92 = arith.subf %91, %87 : vector<8x32xf32>
    %93 = arith.mulf %92, %90 : vector<8x32xf32>
    %94 = arith.truncf %93 : vector<8x32xf32> to vector<8x32xbf16>
    %cst_40 = arith.constant dense<0.000000e+00> : vector<8x32xf32>
    %95 = tpu.matmul %94, %72, %cst_40 {dimension_numbers = #tpu.dot_dimension_numbers<[1], [0], [0], [1], [0, 0, 1, 1], [], []>} : vector<8x32xbf16>, vector<32x32xbf16>, vector<8x32xf32> -> vector<8x32xf32>
    %cst_41 = arith.constant dense<0.000000e+00> : vector<8x32xf32>
    %96 = tpu.matmul %94, %73, %cst_41 {dimension_numbers = #tpu.dot_dimension_numbers<[1], [0], [0], [1], [0, 0, 1, 1], [], []>} : vector<8x32xbf16>, vector<32x32xbf16>, vector<8x32xf32> -> vector<8x32xf32>
    %cst_42 = arith.constant dense<0.000000e+00> : vector<8x32xf32>
    %97 = tpu.matmul %94, %74, %cst_42 {dimension_numbers = #tpu.dot_dimension_numbers<[1], [0], [0], [1], [0, 0, 1, 1], [], []>} : vector<8x32xbf16>, vector<32x32xbf16>, vector<8x32xf32> -> vector<8x32xf32>
    %98 = arith.addf %35, %95 : vector<8x32xf32>
    %99 = arith.negf %98 : vector<8x32xf32>
    %100 = math.exp %99 : vector<8x32xf32>
    %cst_43 = arith.constant 1.000000e+00 : f32
    %101 = vector.broadcast %cst_43 : f32 to vector<8x32xf32>
    %102 = arith.addf %101, %100 : vector<8x32xf32>
    %103 = arith.divf %101, %102 : vector<8x32xf32>
    %104 = arith.addf %36, %96 : vector<8x32xf32>
    %105 = arith.negf %104 : vector<8x32xf32>
    %106 = math.exp %105 : vector<8x32xf32>
    %cst_44 = arith.constant 1.000000e+00 : f32
    %107 = vector.broadcast %cst_44 : f32 to vector<8x32xf32>
    %108 = arith.addf %107, %106 : vector<8x32xf32>
    %109 = arith.divf %107, %108 : vector<8x32xf32>
    %110 = arith.addf %97, %77 : vector<8x32xf32>
    %111 = arith.mulf %103, %110 : vector<8x32xf32>
    %112 = arith.addf %37, %111 : vector<8x32xf32>
    %113 = math.tanh %112 : vector<8x32xf32>
    %cst_45 = arith.constant 1.000000e+00 : f32
    %114 = vector.broadcast %cst_45 : f32 to vector<8x32xf32>
    %115 = arith.subf %114, %109 : vector<8x32xf32>
    %116 = arith.mulf %115, %113 : vector<8x32xf32>
    %117 = arith.mulf %109, %93 : vector<8x32xf32>
    %118 = arith.addf %116, %117 : vector<8x32xf32>
    %119 = arith.truncf %118 : vector<8x32xf32> to vector<8x32xbf16>
    %cst_46 = arith.constant dense<0.000000e+00> : vector<8x32xf32>
    %120 = tpu.matmul %119, %72, %cst_46 {dimension_numbers = #tpu.dot_dimension_numbers<[1], [0], [0], [1], [0, 0, 1, 1], [], []>} : vector<8x32xbf16>, vector<32x32xbf16>, vector<8x32xf32> -> vector<8x32xf32>
    %cst_47 = arith.constant dense<0.000000e+00> : vector<8x32xf32>
    %121 = tpu.matmul %119, %73, %cst_47 {dimension_numbers = #tpu.dot_dimension_numbers<[1], [0], [0], [1], [0, 0, 1, 1], [], []>} : vector<8x32xbf16>, vector<32x32xbf16>, vector<8x32xf32> -> vector<8x32xf32>
    %cst_48 = arith.constant dense<0.000000e+00> : vector<8x32xf32>
    %122 = tpu.matmul %119, %74, %cst_48 {dimension_numbers = #tpu.dot_dimension_numbers<[1], [0], [0], [1], [0, 0, 1, 1], [], []>} : vector<8x32xbf16>, vector<32x32xbf16>, vector<8x32xf32> -> vector<8x32xf32>
    %123 = arith.addf %52, %120 : vector<8x32xf32>
    %124 = arith.negf %123 : vector<8x32xf32>
    %125 = math.exp %124 : vector<8x32xf32>
    %cst_49 = arith.constant 1.000000e+00 : f32
    %126 = vector.broadcast %cst_49 : f32 to vector<8x32xf32>
    %127 = arith.addf %126, %125 : vector<8x32xf32>
    %128 = arith.divf %126, %127 : vector<8x32xf32>
    %129 = arith.addf %53, %121 : vector<8x32xf32>
    %130 = arith.negf %129 : vector<8x32xf32>
    %131 = math.exp %130 : vector<8x32xf32>
    %cst_50 = arith.constant 1.000000e+00 : f32
    %132 = vector.broadcast %cst_50 : f32 to vector<8x32xf32>
    %133 = arith.addf %132, %131 : vector<8x32xf32>
    %134 = arith.divf %132, %133 : vector<8x32xf32>
    %135 = arith.addf %122, %77 : vector<8x32xf32>
    %136 = arith.mulf %128, %135 : vector<8x32xf32>
    %137 = arith.addf %54, %136 : vector<8x32xf32>
    %138 = math.tanh %137 : vector<8x32xf32>
    %cst_51 = arith.constant 1.000000e+00 : f32
    %139 = vector.broadcast %cst_51 : f32 to vector<8x32xf32>
    %140 = arith.subf %139, %134 : vector<8x32xf32>
    %141 = arith.mulf %140, %138 : vector<8x32xf32>
    %142 = arith.mulf %134, %118 : vector<8x32xf32>
    %143 = arith.addf %141, %142 : vector<8x32xf32>
    %144 = arith.truncf %143 : vector<8x32xf32> to vector<8x32xbf16>
    %cst_52 = arith.constant dense<0.000000e+00> : vector<8x32xf32>
    %145 = tpu.matmul %144, %72, %cst_52 {dimension_numbers = #tpu.dot_dimension_numbers<[1], [0], [0], [1], [0, 0, 1, 1], [], []>} : vector<8x32xbf16>, vector<32x32xbf16>, vector<8x32xf32> -> vector<8x32xf32>
    %cst_53 = arith.constant dense<0.000000e+00> : vector<8x32xf32>
    %146 = tpu.matmul %144, %73, %cst_53 {dimension_numbers = #tpu.dot_dimension_numbers<[1], [0], [0], [1], [0, 0, 1, 1], [], []>} : vector<8x32xbf16>, vector<32x32xbf16>, vector<8x32xf32> -> vector<8x32xf32>
    %cst_54 = arith.constant dense<0.000000e+00> : vector<8x32xf32>
    %147 = tpu.matmul %144, %74, %cst_54 {dimension_numbers = #tpu.dot_dimension_numbers<[1], [0], [0], [1], [0, 0, 1, 1], [], []>} : vector<8x32xbf16>, vector<32x32xbf16>, vector<8x32xf32> -> vector<8x32xf32>
    %148 = arith.addf %69, %145 : vector<8x32xf32>
    %149 = arith.negf %148 : vector<8x32xf32>
    %150 = math.exp %149 : vector<8x32xf32>
    %cst_55 = arith.constant 1.000000e+00 : f32
    %151 = vector.broadcast %cst_55 : f32 to vector<8x32xf32>
    %152 = arith.addf %151, %150 : vector<8x32xf32>
    %153 = arith.divf %151, %152 : vector<8x32xf32>
    %154 = arith.addf %70, %146 : vector<8x32xf32>
    %155 = arith.negf %154 : vector<8x32xf32>
    %156 = math.exp %155 : vector<8x32xf32>
    %cst_56 = arith.constant 1.000000e+00 : f32
    %157 = vector.broadcast %cst_56 : f32 to vector<8x32xf32>
    %158 = arith.addf %157, %156 : vector<8x32xf32>
    %159 = arith.divf %157, %158 : vector<8x32xf32>
    %160 = arith.addf %147, %77 : vector<8x32xf32>
    %161 = arith.mulf %153, %160 : vector<8x32xf32>
    %162 = arith.addf %71, %161 : vector<8x32xf32>
    %163 = math.tanh %162 : vector<8x32xf32>
    %cst_57 = arith.constant 1.000000e+00 : f32
    %164 = vector.broadcast %cst_57 : f32 to vector<8x32xf32>
    %165 = arith.subf %164, %159 : vector<8x32xf32>
    %166 = arith.mulf %165, %163 : vector<8x32xf32>
    %167 = arith.mulf %159, %143 : vector<8x32xf32>
    %168 = arith.addf %166, %167 : vector<8x32xf32>
    %c0_58 = arith.constant 0 : index
    %c0_59 = arith.constant 0 : index
    %169 = vector.load %arg11[%c0_58, %c0_59] : memref<8x32xf32, #tpu.memory_space<vmem>>, vector<8x32xf32>
    tpu.vector_store %arg11[%c0_58, %c0_59], %168 {strides = array<i32>} : memref<8x32xf32, #tpu.memory_space<vmem>>, vector<8x32xf32>,
    return
  }
}

</mosaic_0001>

<llo_original>
// kernel: tpu_custom_call.1
$region0: #{tpu_custom_call.1}
  #allocation0 [shape = 'u32[]', space=smem, size = 0x4, offset = 0x4, fixed_abs, tag = 'smem constant byte address 0x4 - core index']
  #allocation1 [shape = 'u32[144,128]{1,0:T(1,128)}', space=vmem, size = 0x12000, scoped, tag = 'internal scratch']
  %s0 = inlined_call_operand.vmem [shape: f32[8,24], index: 0, kind: input, shape index: {}]
  %s1 = inlined_call_operand.vmem [shape: f32[8,4], index: 1, kind: input, shape index: {}]
  %s2 = inlined_call_operand.hbm [shape: f32[8,68], index: 2, kind: input, shape index: {}]
  %s3 = inlined_call_operand.hbm [shape: bf16[6,96], index: 3, kind: input, shape index: {}]
  %s4 = inlined_call_operand.hbm [shape: f32[1,96], index: 4, kind: input, shape index: {}]
  %s5 = inlined_call_operand.hbm [shape: bf16[17,96], index: 5, kind: input, shape index: {}]
  %s6 = inlined_call_operand.hbm [shape: f32[1,96], index: 6, kind: input, shape index: {}]
  %s7 = inlined_call_operand.vmem [shape: bf16[32,32], index: 7, kind: input, shape index: {}]
  %s8 = inlined_call_operand.hbm [shape: bf16[32,32], index: 8, kind: input, shape index: {}]
  %s9 = inlined_call_operand.hbm [shape: bf16[32,32], index: 9, kind: input, shape index: {}]
  %s10 = inlined_call_operand.vmem [shape: f32[1,32], index: 10, kind: input, shape index: {}]
  %s11 = inlined_call_operand.hbm [shape: f32[8,32], index: 11, kind: output, shape index: {}]
  %s12 = sld [smem:[#allocation0]]
  $region82: #{tpu_custom_call.1} parent=0
    _
  %s14 = ssub.s32 1, %s12
  %s15 = scalar_select 0, %s14, %s12
  $region1: #{tpu_custom_call.1} parent=0
    #allocation2 [shape = 'u8[4096]{0}', space=vmem, size = 0x1000, scoped, tag = 'input window, operand 2, single buffered']
    #allocation3 [shape = 's32[1]{0}', space=sflag, size = 0x4, scoped, tag = 'scoped memory for tpu_custom_call.1']
    #allocation4 [shape = 's32[1]{0}', space=sflag, size = 0x4, scoped, tag = 'scoped memory for tpu_custom_call.1']
    #allocation5 [shape = 'u8[2048]{0}', space=vmem, size = 0x800, scoped, tag = 'input window, operand 3, single buffered']
    #allocation6 [shape = 's32[1]{0}', space=sflag, size = 0x4, scoped, tag = 'scoped memory for tpu_custom_call.1']
    #allocation7 [shape = 'u8[512]{0}', space=vmem, size = 0x400, scoped, tag = 'input window, operand 4, single buffered']
    #allocation8 [shape = 'u8[6144]{0}', space=vmem, size = 0x1800, scoped, tag = 'input window, operand 5, single buffered']
    #allocation9 [shape = 's32[1]{0}', space=sflag, size = 0x4, scoped, tag = 'scoped memory for tpu_custom_call.1']
    #allocation10 [shape = 'u8[512]{0}', space=vmem, size = 0x400, scoped, tag = 'input window, operand 6, single buffered']
    #allocation11 [shape = 'u8[8192]{0}', space=vmem, size = 0x2000, scoped, tag = 'input window, operand 8, single buffered']
    #allocation12 [shape = 's32[1]{0}', space=sflag, size = 0x4, scoped, tag = 'scoped memory for tpu_custom_call.1']
    #allocation13 [shape = 'u8[8192]{0}', space=vmem, size = 0x2000, scoped, tag = 'input window, operand 9, single buffered']
    #allocation14 [shape = 'u8[4096]{0}', space=vmem, size = 0x1000, scoped, tag = 'output window, operand 0, single buffered']
    %16 = vsyncpa [#allocation3], 0
    %17 = vsyncpa [#allocation6], 0
    %18 = vsyncpa [#allocation9], 0
    %19 = vsyncpa [#allocation12], 0
    %20 = vsyncpa [#allocation4], 0
    // Predicated region
    $region2: #{tpu_custom_call.1} parent=1 // pred_check
      _
    $region3: #{tpu_custom_call.1} parent=1 // pred_check_branch
      %22 = sbr.rel (0) target = $region5
    $region4: #{tpu_custom_call.1} parent=1 // pred_region
      _
    $region5: #{tpu_custom_call.1} parent=1 // pred_fallthru
      _
    // Predicated region
    $region6: #{tpu_custom_call.1} parent=1 // pred_check
      _
    $region7: #{tpu_custom_call.1} parent=1 // pred_check_branch
      %24 = sbr.rel (0) target = $region9
    $region8: #{tpu_custom_call.1} parent=1 // pred_region
      _
    $region9: #{tpu_custom_call.1} parent=1 // pred_fallthru
      _
    // Predicated region
    $region10: #{tpu_custom_call.1} parent=1 // pred_check
      _
    $region11: #{tpu_custom_call.1} parent=1 // pred_check_branch
      %26 = sbr.rel (0) target = $region13
    $region12: #{tpu_custom_call.1} parent=1 // pred_region
      %s28 = ssub.s32 128, 128
      %29 = vsyncadd [#allocation3], %s28
      %s31 = sshll.u32 [#allocation2], 4
      %s32 = int_to_ptr.vmem [resolvable:$true] %s31
      %34 = dma.hbm_to_vmem [thread:$0]  %s2, 128, %s32, [#allocation3]
    $region13: #{tpu_custom_call.1} parent=1 // pred_fallthru
      _
    // Predicated region
    $region14: #{tpu_custom_call.1} parent=1 // pred_check
      _
    $region15: #{tpu_custom_call.1} parent=1 // pred_check_branch
      %36 = sbr.rel (0) target = $region17
    $region16: #{tpu_custom_call.1} parent=1 // pred_region
      %s38 = ssub.s32 64, 64
      %39 = vsyncadd [#allocation6], %s38
      %s41 = sshll.u32 [#allocation5], 4
      %s42 = int_to_ptr.vmem [resolvable:$true] %s41
      %44 = dma.hbm_to_vmem [thread:$0]  %s3, 64, %s42, [#allocation6]
    $region17: #{tpu_custom_call.1} parent=1 // pred_fallthru
      _
    // Predicated region
    $region18: #{tpu_custom_call.1} parent=1 // pred_check
      _
    $region19: #{tpu_custom_call.1} parent=1 // pred_check_branch
      %46 = sbr.rel (0) target = $region21
    $region20: #{tpu_custom_call.1} parent=1 // pred_region
      %s48 = ssub.s32 16, 16
      %49 = vsyncadd [#allocation6], %s48
      %s51 = sshll.u32 [#allocation7], 4
      %s52 = int_to_ptr.vmem [resolvable:$true] %s51
      %54 = dma.hbm_to_vmem [thread:$0]  %s4, 16, %s52, [#allocation6]
    $region21: #{tpu_custom_call.1} parent=1 // pred_fallthru
      _
    // Predicated region
    $region22: #{tpu_custom_call.1} parent=1 // pred_check
      _
    $region23: #{tpu_custom_call.1} parent=1 // pred_check_branch
      %56 = sbr.rel (0) target = $region25
    $region24: #{tpu_custom_call.1} parent=1 // pred_region
      %s58 = ssub.s32 192, 192
      %59 = vsyncadd [#allocation9], %s58
      %s60 = sshll.u32 [#allocation8], 4
      %s61 = int_to_ptr.vmem [resolvable:$true] %s60
      %66 = dma.hbm_to_vmem [thread:$0]  %s5, 192, %s61, [#allocation9], 64, 64, 4
    $region25: #{tpu_custom_call.1} parent=1 // pred_fallthru
      _
    // Predicated region
    $region26: #{tpu_custom_call.1} parent=1 // pred_check
      _
    $region27: #{tpu_custom_call.1} parent=1 // pred_check_branch
      %68 = sbr.rel (0) target = $region29
    $region28: #{tpu_custom_call.1} parent=1 // pred_region
      %s70 = ssub.s32 16, 16
      %71 = vsyncadd [#allocation9], %s70
      %s73 = sshll.u32 [#allocation10], 4
      %s74 = int_to_ptr.vmem [resolvable:$true] %s73
      %76 = dma.hbm_to_vmem [thread:$0]  %s6, 16, %s74, [#allocation9]
    $region29: #{tpu_custom_call.1} parent=1 // pred_fallthru
      _
    // Predicated region
    $region30: #{tpu_custom_call.1} parent=1 // pred_check
      _
    $region31: #{tpu_custom_call.1} parent=1 // pred_check_branch
      %78 = sbr.rel (0) target = $region33
    $region32: #{tpu_custom_call.1} parent=1 // pred_region
      _
    $region33: #{tpu_custom_call.1} parent=1 // pred_fallthru
      _
    // Predicated region
    $region34: #{tpu_custom_call.1} parent=1 // pred_check
      _
    $region35: #{tpu_custom_call.1} parent=1 // pred_check_branch
      %80 = sbr.rel (0) target = $region37
    $region36: #{tpu_custom_call.1} parent=1 // pred_region
      %s82 = ssub.s32 256, 256
      %83 = vsyncadd [#allocation12], %s82
      %s84 = sshll.u32 [#allocation11], 4
      %s85 = int_to_ptr.vmem [resolvable:$true] %s84
      %90 = dma.hbm_to_vmem [thread:$0]  %s8, 256, %s85, [#allocation12], 64, 64, 4
    $region37: #{tpu_custom_call.1} parent=1 // pred_fallthru
      _
    // Predicated region
    $region38: #{tpu_custom_call.1} parent=1 // pred_check
      _
    $region39: #{tpu_custom_call.1} parent=1 // pred_check_branch
      %92 = sbr.rel (0) target = $region41
    $region40: #{tpu_custom_call.1} parent=1 // pred_region
      %s94 = ssub.s32 256, 256
      %95 = vsyncadd [#allocation12], %s94
      %s96 = sshll.u32 [#allocation13], 4
      %s97 = int_to_ptr.vmem [resolvable:$true] %s96
      %102 = dma.hbm_to_vmem [thread:$0]  %s9, 256, %s97, [#allocation12], 64, 64, 4
    $region41: #{tpu_custom_call.1} parent=1 // pred_fallthru
      _
    // Predicated region
    $region42: #{tpu_custom_call.1} parent=1 // pred_check
      _
    $region43: #{tpu_custom_call.1} parent=1 // pred_check_branch
      %104 = sbr.rel (0) target = $region45
    $region44: #{tpu_custom_call.1} parent=1 // pred_region
      _
    $region45: #{tpu_custom_call.1} parent=1 // pred_fallthru
      _
    // Predicated region
    $region46: #{tpu_custom_call.1} parent=1 // pred_check
      _
    $region47: #{tpu_custom_call.1} parent=1 // pred_check_branch
      %106 = sbr.rel (0) target = $region49
    $region48: #{tpu_custom_call.1} parent=1 // pred_region
      %107 = dma.done [#allocation3], 128
    $region49: #{tpu_custom_call.1} parent=1 // pred_fallthru
      _
    // Predicated region
    $region50: #{tpu_custom_call.1} parent=1 // pred_check
      _
    $region51: #{tpu_custom_call.1} parent=1 // pred_check_branch
      %109 = sbr.rel (0) target = $region53
    $region52: #{tpu_custom_call.1} parent=1 // pred_region
      %110 = dma.done [#allocation6], 64
    $region53: #{tpu_custom_call.1} parent=1 // pred_fallthru
      _
    // Predicated region
    $region54: #{tpu_custom_call.1} parent=1 // pred_check
      _
    $region55: #{tpu_custom_call.1} parent=1 // pred_check_branch
      %112 = sbr.rel (0) target = $region57
    $region56: #{tpu_custom_call.1} parent=1 // pred_region
      %113 = dma.done [#allocation6], 16
    $region57: #{tpu_custom_call.1} parent=1 // pred_fallthru
      _
    // Predicated region
    $region58: #{tpu_custom_call.1} parent=1 // pred_check
      _
    $region59: #{tpu_custom_call.1} parent=1 // pred_check_branch
      %115 = sbr.rel (0) target = $region61
    $region60: #{tpu_custom_call.1} parent=1 // pred_region
      %116 = dma.done [#allocation9], 192
    $region61: #{tpu_custom_call.1} parent=1 // pred_fallthru
      _
    // Predicated region
    $region62: #{tpu_custom_call.1} parent=1 // pred_check
      _
    $region63: #{tpu_custom_call.1} parent=1 // pred_check_branch
      %118 = sbr.rel (0) target = $region65
    $region64: #{tpu_custom_call.1} parent=1 // pred_region
      %119 = dma.done [#allocation9], 16
    $region65: #{tpu_custom_call.1} parent=1 // pred_fallthru
      _
    // Predicated region
    $region66: #{tpu_custom_call.1} parent=1 // pred_check
      _
    $region67: #{tpu_custom_call.1} parent=1 // pred_check_branch
      %121 = sbr.rel (0) target = $region69
    $region68: #{tpu_custom_call.1} parent=1 // pred_region
      %122 = dma.done [#allocation12], 256
    $region69: #{tpu_custom_call.1} parent=1 // pred_fallthru
      _
    // Predicated region
    $region70: #{tpu_custom_call.1} parent=1 // pred_check
      _
    $region71: #{tpu_custom_call.1} parent=1 // pred_check_branch
      %124 = sbr.rel (0) target = $region73
    $region72: #{tpu_custom_call.1} parent=1 // pred_region
      %125 = dma.done [#allocation12], 256
    $region73: #{tpu_custom_call.1} parent=1 // pred_fallthru
      _
    %v127 = vld [vmem:[#allocation5] sm:$0x7]
    %v128 = vld [vmem:[#allocation8] sm:$0xf]
    %v129 = vld [vmem:[#allocation8 + $0x4] sm:$0xf]
    %v130 = vld [vmem:[#allocation8 + $0x8] sm:$0x1]
    %v131 = vld [vmem:[#allocation7] sm:$0x1]
    %v132 = vld [vmem:[#allocation10] sm:$0x1]
    %v133 = vld [vmem:[%s0] sm:$0xff]
    %v134 = vpack.c.bf16 %v133, %v133
    %v135 = vld [vmem:[#allocation2] sm:$0xff]
    %v136 = vpack.c.bf16 %v135, %v135
    %v137 = vld [vmem:[%s1] sm:$0xff]
    %v141 = vunpack.c.l.b16 %v128
    %v142 = vunpack.c.l.b16 %v129
    %v143 = vunpack.c.l.b16 %v130
    %v144 = vpack.c.b16 %v142, %v141
    %v145 = vpack.c.b16 %v143, %v143
    %vm147 = vcmask 138240
    %v149 = vsel %vm147, %v136, 0
    %vm151 = vcmask 1040384
    %v152 = vsel 0, 4294967295, 65535
    %v153 = vsel %vm151, %v152, 0
    %v155 = vand.u32 %v145, %v153
    %157 = vmatprep.subr.bf16.mxu0 0
    %158 = vmatpush1.bf16.msra.mxu0 0
    %159 = vmatprep.subr.bf16.mxu0 0
    %160 = vmatpush1.bf16.msra.mxu0 0
    %161 = vmatprep.subr.bf16.mxu0 0
    %162 = vmatpush1.bf16.msra.mxu0 0
    %163 = vmatprep.subr.bf16.mxu0 0
    %164 = vmatpush1.bf16.msra.mxu0 0
    %165 = vmatprep.subr.bf16.mxu0 0
    %166 = vmatpush1.bf16.msra.mxu0 0
    %167 = vmatprep.subr.bf16.mxu0 0
    %168 = vmatpush1.bf16.msra.mxu0 0
    %169 = vmatprep.subr.bf16.mxu0 0
    %170 = vmatpush1.bf16.msra.mxu0 %v155
    %171 = vmatprep.subr.bf16.mxu0 0
    %172 = vmatpush1.bf16.msra.mxu0 %v144
    %173 = vmatprep.subr.bf16.mxu0 0
    %174 = vmatpush2.bf16.msra.mxu0 0
    %175 = vmatprep.subr.bf16.mxu0 0
    %176 = vmatpush2.bf16.msra.mxu0 0
    %177 = vmatprep.subr.bf16.mxu0 0
    %178 = vmatpush2.bf16.msra.mxu0 0
    %179 = vmatprep.subr.bf16.mxu0 0
    %180 = vmatpush2.bf16.msra.mxu0 0
    %181 = vmatprep.subr.bf16.mxu0 0
    %182 = vmatpush2.bf16.msra.mxu0 0
    %183 = vmatprep.subr.bf16.mxu0 0
    %184 = vmatpush2.bf16.msra.mxu0 0
    %185 = vmatprep.subr.bf16.mxu0 0
    %186 = vmatpush2.bf16.msra.mxu0 0
    %187 = vmatprep.subr.bf16.mxu0 0
    %188 = vmatpush2.bf16.msra.mxu0 0
    %189 = vmatprep.mubr.bf16.mxu0 0
    %190 = vmatmul.mubr.bf16.gmra.mxu0 %v149
    %v191 = vpop.f32.mrf.mxu0
    %v192 = vadd.f32 0.0, %v191
    %v193 = vpop.f32.mrf.mxu0
    %v194 = vpop.f32.mrf.mxu0
    %v195 = vpop.f32.mrf.mxu0
    %196 = vdwg.mxu0
    %vm197 = vcmask 48128
    %v199 = vsel %vm197, %v134, 0
    %vm201 = vcmask 1042432
    %v203 = vsel %vm201, %v127, 0
    %205 = vmatprep.subr.bf16.mxu0 0
    %206 = vmatpush1.bf16.msra.mxu0 0
    %207 = vmatprep.subr.bf16.mxu0 0
    %208 = vmatpush1.bf16.msra.mxu0 0
    %209 = vmatprep.subr.bf16.mxu0 0
    %210 = vmatpush1.bf16.msra.mxu0 0
    %211 = vmatprep.subr.bf16.mxu0 0
    %212 = vmatpush1.bf16.msra.mxu0 0
    %213 = vmatprep.subr.bf16.mxu0 0
    %214 = vmatpush1.bf16.msra.mxu0 0
    %215 = vmatprep.subr.bf16.mxu0 0
    %216 = vmatpush1.bf16.msra.mxu0 0
    %217 = vmatprep.subr.bf16.mxu0 0
    %218 = vmatpush1.bf16.msra.mxu0 0
    %219 = vmatprep.subr.bf16.mxu0 0
    %220 = vmatpush1.bf16.msra.mxu0 %v203
    %221 = vmatprep.subr.bf16.mxu0 0
    %222 = vmatpush2.bf16.msra.mxu0 0
    %223 = vmatprep.subr.bf16.mxu0 0
    %224 = vmatpush2.bf16.msra.mxu0 0
    %225 = vmatprep.subr.bf16.mxu0 0
    %226 = vmatpush2.bf16.msra.mxu0 0
    %227 = vmatprep.subr.bf16.mxu0 0
    %228 = vmatpush2.bf16.msra.mxu0 0
    %229 = vmatprep.subr.bf16.mxu0 0
    %230 = vmatpush2.bf16.msra.mxu0 0
    %231 = vmatprep.subr.bf16.mxu0 0
    %232 = vmatpush2.bf16.msra.mxu0 0
    %233 = vmatprep.subr.bf16.mxu0 0
    %234 = vmatpush2.bf16.msra.mxu0 0
    %235 = vmatprep.subr.bf16.mxu0 0
    %236 = vmatpush2.bf16.msra.mxu0 0
    %237 = vmatprep.mubr.bf16.mxu0 0
    %238 = vmatmul.mubr.bf16.gmra.mxu0 %v199
    %v239 = vpop.f32.mrf.mxu0
    %v240 = vadd.f32 %v192, %v239
    %v241 = vpop.f32.mrf.mxu0
    %v242 = vpop.f32.mrf.mxu0
    %v243 = vpop.f32.mrf.mxu0
    %244 = vdwg.mxu0
    %246 = vset.pattern.permute.xlu0 0
    %247 = vperm.xlu0 %246, %v137
    %v248 = vpop.permute.xlu0 %247
    %v251 = vlaneseq
    %v252 = vshrl.u32 %v251, 7
    %v253 = vsub.s32 0, %v252
    %v254 = vrot.slane %v131, %v253
    %v256 = vmul.f32 %v248, %v254
    %v257 = vadd.f32 %v240, %v256
    %v259 = vlaneseq
    %v260 = vshrl.u32 %v259, 7
    %v261 = vsub.s32 0, %v260
    %v262 = vrot.slane %v132, %v261
    %v264 = vadd.f32 %v257, %v262
    %266 = vrot.lane.b32.xlu0 %v136, 111
    %v267 = vpop.permute.xlu0 %266
    %v269 = vsel %vm147, %v267, 0
    %271 = vmatprep.subr.bf16.mxu0 0
    %272 = vmatpush1.bf16.msra.mxu0 0
    %273 = vmatprep.subr.bf16.mxu0 0
    %274 = vmatpush1.bf16.msra.mxu0 0
    %275 = vmatprep.subr.bf16.mxu0 0
    %276 = vmatpush1.bf16.msra.mxu0 0
    %277 = vmatprep.subr.bf16.mxu0 0
    %278 = vmatpush1.bf16.msra.mxu0 0
    %279 = vmatprep.subr.bf16.mxu0 0
    %280 = vmatpush1.bf16.msra.mxu0 0
    %281 = vmatprep.subr.bf16.mxu0 0
    %282 = vmatpush1.bf16.msra.mxu0 0
    %283 = vmatprep.subr.bf16.mxu0 0
    %284 = vmatpush1.bf16.msra.mxu0 %v155
    %285 = vmatprep.subr.bf16.mxu0 0
    %286 = vmatpush1.bf16.msra.mxu0 %v144
    %287 = vmatprep.subr.bf16.mxu0 0
    %288 = vmatpush2.bf16.msra.mxu0 0
    %289 = vmatprep.subr.bf16.mxu0 0
    %290 = vmatpush2.bf16.msra.mxu0 0
    %291 = vmatprep.subr.bf16.mxu0 0
    %292 = vmatpush2.bf16.msra.mxu0 0
    %293 = vmatprep.subr.bf16.mxu0 0
    %294 = vmatpush2.bf16.msra.mxu0 0
    %295 = vmatprep.subr.bf16.mxu0 0
    %296 = vmatpush2.bf16.msra.mxu0 0
    %297 = vmatprep.subr.bf16.mxu0 0
    %298 = vmatpush2.bf16.msra.mxu0 0
    %299 = vmatprep.subr.bf16.mxu0 0
    %300 = vmatpush2.bf16.msra.mxu0 0
    %301 = vmatprep.subr.bf16.mxu0 0
    %302 = vmatpush2.bf16.msra.mxu0 0
    %303 = vmatprep.mubr.bf16.mxu0 0
    %304 = vmatmul.mubr.bf16.gmra.mxu0 %v269
    %v305 = vpop.f32.mrf.mxu0
    %v306 = vadd.f32 0.0, %v305
    %v307 = vpop.f32.mrf.mxu0
    %v308 = vpop.f32.mrf.mxu0
    %v309 = vpop.f32.mrf.mxu0
    %310 = vdwg.mxu0
    %312 = vrot.lane.b32.xlu0 %v134, 122
    %v313 = vpop.permute.xlu0 %312
    %v315 = vsel %vm197, %v313, 0
    %317 = vmatprep.subr.bf16.mxu0 0
    %318 = vmatpush1.bf16.msra.mxu0 0
    %319 = vmatprep.subr.bf16.mxu0 0
    %320 = vmatpush1.bf16.msra.mxu0 0
    %321 = vmatprep.subr.bf16.mxu0 0
    %322 = vmatpush1.bf16.msra.mxu0 0
    %323 = vmatprep.subr.bf16.mxu0 0
    %324 = vmatpush1.bf16.msra.mxu0 0
    %325 = vmatprep.subr.bf16.mxu0 0
    %326 = vmatpush1.bf16.msra.mxu0 0
    %327 = vmatprep.subr.bf16.mxu0 0
    %328 = vmatpush1.bf16.msra.mxu0 0
    %329 = vmatprep.subr.bf16.mxu0 0
    %330 = vmatpush1.bf16.msra.mxu0 0
    %331 = vmatprep.subr.bf16.mxu0 0
    %332 = vmatpush1.bf16.msra.mxu0 %v203
    %333 = vmatprep.subr.bf16.mxu0 0
    %334 = vmatpush2.bf16.msra.mxu0 0
    %335 = vmatprep.subr.bf16.mxu0 0
    %336 = vmatpush2.bf16.msra.mxu0 0
    %337 = vmatprep.subr.bf16.mxu0 0
    %338 = vmatpush2.bf16.msra.mxu0 0
    %339 = vmatprep.subr.bf16.mxu0 0
    %340 = vmatpush2.bf16.msra.mxu0 0
    %341 = vmatprep.subr.bf16.mxu0 0
    %342 = vmatpush2.bf16.msra.mxu0 0
    %343 = vmatprep.subr.bf16.mxu0 0
    %344 = vmatpush2.bf16.msra.mxu0 0
    %345 = vmatprep.subr.bf16.mxu0 0
    %346 = vmatpush2.bf16.msra.mxu0 0
    %347 = vmatprep.subr.bf16.mxu0 0
    %348 = vmatpush2.bf16.msra.mxu0 0
    %349 = vmatprep.mubr.bf16.mxu0 0
    %350 = vmatmul.mubr.bf16.gmra.mxu0 %v315
    %v351 = vpop.f32.mrf.mxu0
    %v352 = vadd.f32 %v306, %v351
    %v353 = vpop.f32.mrf.mxu0
    %v354 = vpop.f32.mrf.mxu0
    %v355 = vpop.f32.mrf.mxu0
    %356 = vdwg.mxu0
    %357 = vset.pattern.permute.xlu0 1
    %358 = vperm.xlu0 %357, %v137
    %v359 = vpop.permute.xlu0 %358
    %v361 = vmul.f32 %v359, %v254
    %v362 = vadd.f32 %v352, %v361
    %v363 = vadd.f32 %v362, %v262
    %364 = vrot.lane.b32.xlu0 %v136, 94
    %v365 = vpop.permute.xlu0 %364
    %v367 = vsel %vm147, %v365, 0
    %369 = vmatprep.subr.bf16.mxu0 0
    %370 = vmatpush1.bf16.msra.mxu0 0
    %371 = vmatprep.subr.bf16.mxu0 0
    %372 = vmatpush1.bf16.msra.mxu0 0
    %373 = vmatprep.subr.bf16.mxu0 0
    %374 = vmatpush1.bf16.msra.mxu0 0
    %375 = vmatprep.subr.bf16.mxu0 0
    %376 = vmatpush1.bf16.msra.mxu0 0
    %377 = vmatprep.subr.bf16.mxu0 0
    %378 = vmatpush1.bf16.msra.mxu0 0
    %379 = vmatprep.subr.bf16.mxu0 0
    %380 = vmatpush1.bf16.msra.mxu0 0
    %381 = vmatprep.subr.bf16.mxu0 0
    %382 = vmatpush1.bf16.msra.mxu0 %v155
    %383 = vmatprep.subr.bf16.mxu0 0
    %384 = vmatpush1.bf16.msra.mxu0 %v144
    %385 = vmatprep.subr.bf16.mxu0 0
    %386 = vmatpush2.bf16.msra.mxu0 0
    %387 = vmatprep.subr.bf16.mxu0 0
    %388 = vmatpush2.bf16.msra.mxu0 0
    %389 = vmatprep.subr.bf16.mxu0 0
    %390 = vmatpush2.bf16.msra.mxu0 0
    %391 = vmatprep.subr.bf16.mxu0 0
    %392 = vmatpush2.bf16.msra.mxu0 0
    %393 = vmatprep.subr.bf16.mxu0 0
    %394 = vmatpush2.bf16.msra.mxu0 0
    %395 = vmatprep.subr.bf16.mxu0 0
    %396 = vmatpush2.bf16.msra.mxu0 0
    %397 = vmatprep.subr.bf16.mxu0 0
    %398 = vmatpush2.bf16.msra.mxu0 0
    %399 = vmatprep.subr.bf16.mxu0 0
    %400 = vmatpush2.bf16.msra.mxu0 0
    %401 = vmatprep.mubr.bf16.mxu0 0
    %402 = vmatmul.mubr.bf16.gmra.mxu0 %v367
    %v403 = vpop.f32.mrf.mxu0
    %v404 = vadd.f32 0.0, %v403
    %v405 = vpop.f32.mrf.mxu0
    %v406 = vpop.f32.mrf.mxu0
    %v407 = vpop.f32.mrf.mxu0
    %408 = vdwg.mxu0
    %409 = vrot.lane.b32.xlu0 %v134, 116
    %v410 = vpop.permute.xlu0 %409
    %v412 = vsel %vm197, %v410, 0
    %414 = vmatprep.subr.bf16.mxu0 0
    %415 = vmatpush1.bf16.msra.mxu0 0
    %416 = vmatprep.subr.bf16.mxu0 0
    %417 = vmatpush1.bf16.msra.mxu0 0
    %418 = vmatprep.subr.bf16.mxu0 0
    %419 = vmatpush1.bf16.msra.mxu0 0
    %420 = vmatprep.subr.bf16.mxu0 0
    %421 = vmatpush1.bf16.msra.mxu0 0
    %422 = vmatprep.subr.bf16.mxu0 0
    %423 = vmatpush1.bf16.msra.mxu0 0
    %424 = vmatprep.subr.bf16.mxu0 0
    %425 = vmatpush1.bf16.msra.mxu0 0
    %426 = vmatprep.subr.bf16.mxu0 0
    %427 = vmatpush1.bf16.msra.mxu0 0
    %428 = vmatprep.subr.bf16.mxu0 0
    %429 = vmatpush1.bf16.msra.mxu0 %v203
    %430 = vmatprep.subr.bf16.mxu0 0
    %431 = vmatpush2.bf16.msra.mxu0 0
    %432 = vmatprep.subr.bf16.mxu0 0
    %433 = vmatpush2.bf16.msra.mxu0 0
    %434 = vmatprep.subr.bf16.mxu0 0
    %435 = vmatpush2.bf16.msra.mxu0 0
    %436 = vmatprep.subr.bf16.mxu0 0
    %437 = vmatpush2.bf16.msra.mxu0 0
    %438 = vmatprep.subr.bf16.mxu0 0
    %439 = vmatpush2.bf16.msra.mxu0 0
    %440 = vmatprep.subr.bf16.mxu0 0
    %441 = vmatpush2.bf16.msra.mxu0 0
    %442 = vmatprep.subr.bf16.mxu0 0
    %443 = vmatpush2.bf16.msra.mxu0 0
    %444 = vmatprep.subr.bf16.mxu0 0
    %445 = vmatpush2.bf16.msra.mxu0 0
    %446 = vmatprep.mubr.bf16.mxu0 0
    %447 = vmatmul.mubr.bf16.gmra.mxu0 %v412
    %v448 = vpop.f32.mrf.mxu0
    %v449 = vadd.f32 %v404, %v448
    %v450 = vpop.f32.mrf.mxu0
    %v451 = vpop.f32.mrf.mxu0
    %v452 = vpop.f32.mrf.mxu0
    %453 = vdwg.mxu0
    %454 = vset.pattern.permute.xlu0 2
    %455 = vperm.xlu0 %454, %v137
    %v456 = vpop.permute.xlu0 %455
    %v458 = vmul.f32 %v456, %v254
    %v459 = vadd.f32 %v449, %v458
    %v460 = vadd.f32 %v459, %v262
    %461 = vrot.lane.b32.xlu0 %v136, 77
    %v462 = vpop.permute.xlu0 %461
    %v464 = vsel %vm147, %v462, 0
    %466 = vmatprep.subr.bf16.mxu0 0
    %467 = vmatpush1.bf16.msra.mxu0 0
    %468 = vmatprep.subr.bf16.mxu0 0
    %469 = vmatpush1.bf16.msra.mxu0 0
    %470 = vmatprep.subr.bf16.mxu0 0
    %471 = vmatpush1.bf16.msra.mxu0 0
    %472 = vmatprep.subr.bf16.mxu0 0
    %473 = vmatpush1.bf16.msra.mxu0 0
    %474 = vmatprep.subr.bf16.mxu0 0
    %475 = vmatpush1.bf16.msra.mxu0 0
    %476 = vmatprep.subr.bf16.mxu0 0
    %477 = vmatpush1.bf16.msra.mxu0 0
    %478 = vmatprep.subr.bf16.mxu0 0
    %479 = vmatpush1.bf16.msra.mxu0 %v155
    %480 = vmatprep.subr.bf16.mxu0 0
    %481 = vmatpush1.bf16.msra.mxu0 %v144
    %482 = vmatprep.subr.bf16.mxu0 0
    %483 = vmatpush2.bf16.msra.mxu0 0
    %484 = vmatprep.subr.bf16.mxu0 0
    %485 = vmatpush2.bf16.msra.mxu0 0
    %486 = vmatprep.subr.bf16.mxu0 0
    %487 = vmatpush2.bf16.msra.mxu0 0
    %488 = vmatprep.subr.bf16.mxu0 0
    %489 = vmatpush2.bf16.msra.mxu0 0
    %490 = vmatprep.subr.bf16.mxu0 0
    %491 = vmatpush2.bf16.msra.mxu0 0
    %492 = vmatprep.subr.bf16.mxu0 0
    %493 = vmatpush2.bf16.msra.mxu0 0
    %494 = vmatprep.subr.bf16.mxu0 0
    %495 = vmatpush2.bf16.msra.mxu0 0
    %496 = vmatprep.subr.bf16.mxu0 0
    %497 = vmatpush2.bf16.msra.mxu0 0
    %498 = vmatprep.mubr.bf16.mxu0 0
    %499 = vmatmul.mubr.bf16.gmra.mxu0 %v464
    %v500 = vpop.f32.mrf.mxu0
    %v501 = vadd.f32 0.0, %v500
    %v502 = vpop.f32.mrf.mxu0
    %v503 = vpop.f32.mrf.mxu0
    %v504 = vpop.f32.mrf.mxu0
    %505 = vdwg.mxu0
    %506 = vrot.lane.b32.xlu0 %v134, 110
    %v507 = vpop.permute.xlu0 %506
    %v509 = vsel %vm197, %v507, 0
    %511 = vmatprep.subr.bf16.mxu0 0
    %512 = vmatpush1.bf16.msra.mxu0 0
    %513 = vmatprep.subr.bf16.mxu0 0
    %514 = vmatpush1.bf16.msra.mxu0 0
    %515 = vmatprep.subr.bf16.mxu0 0
    %516 = vmatpush1.bf16.msra.mxu0 0
    %517 = vmatprep.subr.bf16.mxu0 0
    %518 = vmatpush1.bf16.msra.mxu0 0
    %519 = vmatprep.subr.bf16.mxu0 0
    %520 = vmatpush1.bf16.msra.mxu0 0
    %521 = vmatprep.subr.bf16.mxu0 0
    %522 = vmatpush1.bf16.msra.mxu0 0
    %523 = vmatprep.subr.bf16.mxu0 0
    %524 = vmatpush1.bf16.msra.mxu0 0
    %525 = vmatprep.subr.bf16.mxu0 0
    %526 = vmatpush1.bf16.msra.mxu0 %v203
    %527 = vmatprep.subr.bf16.mxu0 0
    %528 = vmatpush2.bf16.msra.mxu0 0
    %529 = vmatprep.subr.bf16.mxu0 0
    %530 = vmatpush2.bf16.msra.mxu0 0
    %531 = vmatprep.subr.bf16.mxu0 0
    %532 = vmatpush2.bf16.msra.mxu0 0
    %533 = vmatprep.subr.bf16.mxu0 0
    %534 = vmatpush2.bf16.msra.mxu0 0
    %535 = vmatprep.subr.bf16.mxu0 0
    %536 = vmatpush2.bf16.msra.mxu0 0
    %537 = vmatprep.subr.bf16.mxu0 0
    %538 = vmatpush2.bf16.msra.mxu0 0
    %539 = vmatprep.subr.bf16.mxu0 0
    %540 = vmatpush2.bf16.msra.mxu0 0
    %541 = vmatprep.subr.bf16.mxu0 0
    %542 = vmatpush2.bf16.msra.mxu0 0
    %543 = vmatprep.mubr.bf16.mxu0 0
    %544 = vmatmul.mubr.bf16.gmra.mxu0 %v509
    %v545 = vpop.f32.mrf.mxu0
    %v546 = vadd.f32 %v501, %v545
    %v547 = vpop.f32.mrf.mxu0
    %v548 = vpop.f32.mrf.mxu0
    %v549 = vpop.f32.mrf.mxu0
    %550 = vdwg.mxu0
    %551 = vset.pattern.permute.xlu0 3
    %552 = vperm.xlu0 %551, %v137
    %v553 = vpop.permute.xlu0 %552
    %v555 = vmul.f32 %v553, %v254
    %v556 = vadd.f32 %v546, %v555
    %v557 = vadd.f32 %v556, %v262
    %v558 = vld [vmem:[%s7] sm:$0xf]
    %v559 = vld [vmem:[%s7 + $0x4] sm:$0xf]
    %v560 = vld [vmem:[%s7 + $0x8] sm:$0xf]
    %v561 = vld [vmem:[%s7 + $0xc] sm:$0xf]
    %v562 = vld [vmem:[#allocation11] sm:$0xf]
    %v563 = vld [vmem:[#allocation11 + $0x4] sm:$0xf]
    %v564 = vld [vmem:[#allocation11 + $0x8] sm:$0xf]
    %v565 = vld [vmem:[#allocation11 + $0xc] sm:$0xf]
    %v566 = vld [vmem:[#allocation13] sm:$0xf]
    %v567 = vld [vmem:[#allocation13 + $0x4] sm:$0xf]
    %v568 = vld [vmem:[#allocation13 + $0x8] sm:$0xf]
    %v569 = vld [vmem:[#allocation13 + $0xc] sm:$0xf]
    %v570 = vld [vmem:[%s10] sm:$0x1]
    %v572 = vlaneseq
    %v573 = vshrl.u32 %v572, 7
    %v574 = vsub.s32 0, %v573
    %v575 = vrot.slane %v570, %v574
    %v577 = vxor.u32 %v264, 2147483648
    %v578 = vmul.f32 %v577, 1.442695
    %v579 = vpow.pop %v578
    %v580 = vadd.f32 %v579, 1.0
    %v581 = vrcp.pop %v580
    %v582 = vmul.f32 1.0, %v581
    %v583 = vmul.f32 %v582, %v575
    %585 = vrot.lane.b32.xlu0 %v583, 64
    %v586 = vpop.permute.xlu0 %585
    %v588 = vadd.f32 %v264, %v586
    %v589 = vtanh.pop %v588
    %v590 = vsub.f32 1.0, %v582
    %592 = vrot.lane.b32.xlu0 %v589, 96
    %v593 = vpop.permute.xlu0 %592
    %v595 = vmul.f32 %v590, %v593
    %v596 = vpack.c.bf16 %v595, %v595
    %598 = vrot.lane.b32.xlu0 %v596, 96
    %v599 = vpop.permute.xlu0 %598
    %v604 = vunpack.c.l.b16 %v558
    %v605 = vunpack.c.l.b16 %v559
    %v606 = vunpack.c.l.b16 %v560
    %v607 = vunpack.c.l.b16 %v561
    %v608 = vpack.c.b16 %v605, %v604
    %v609 = vpack.c.b16 %v607, %v606
    %vm612 = vcmask 261120
    %v614 = vsel %vm612, %v599, 0
    %616 = vmatprep.subr.bf16.mxu0 0
    %617 = vmatpush1.bf16.msra.mxu0 0
    %618 = vmatprep.subr.bf16.mxu0 0
    %619 = vmatpush1.bf16.msra.mxu0 0
    %620 = vmatprep.subr.bf16.mxu0 0
    %621 = vmatpush1.bf16.msra.mxu0 0
    %622 = vmatprep.subr.bf16.mxu0 0
    %623 = vmatpush1.bf16.msra.mxu0 0
    %624 = vmatprep.subr.bf16.mxu0 0
    %625 = vmatpush1.bf16.msra.mxu0 0
    %626 = vmatprep.subr.bf16.mxu0 0
    %627 = vmatpush1.bf16.msra.mxu0 0
    %628 = vmatprep.subr.bf16.mxu0 0
    %629 = vmatpush1.bf16.msra.mxu0 %v609
    %630 = vmatprep.subr.bf16.mxu0 0
    %631 = vmatpush1.bf16.msra.mxu0 %v608
    %632 = vmatprep.subr.bf16.mxu0 0
    %633 = vmatpush2.bf16.msra.mxu0 0
    %634 = vmatprep.subr.bf16.mxu0 0
    %635 = vmatpush2.bf16.msra.mxu0 0
    %636 = vmatprep.subr.bf16.mxu0 0
    %637 = vmatpush2.bf16.msra.mxu0 0
    %638 = vmatprep.subr.bf16.mxu0 0
    %639 = vmatpush2.bf16.msra.mxu0 0
    %640 = vmatprep.subr.bf16.mxu0 0
    %641 = vmatpush2.bf16.msra.mxu0 0
    %642 = vmatprep.subr.bf16.mxu0 0
    %643 = vmatpush2.bf16.msra.mxu0 0
    %644 = vmatprep.subr.bf16.mxu0 0
    %645 = vmatpush2.bf16.msra.mxu0 0
    %646 = vmatprep.subr.bf16.mxu0 0
    %647 = vmatpush2.bf16.msra.mxu0 0
    %648 = vmatprep.mubr.bf16.mxu0 0
    %649 = vmatmul.mubr.bf16.gmra.mxu0 %v614
    %v650 = vpop.f32.mrf.mxu0
    %v651 = vadd.f32 0.0, %v650
    %v652 = vpop.f32.mrf.mxu0
    %v653 = vpop.f32.mrf.mxu0
    %v654 = vpop.f32.mrf.mxu0
    %655 = vdwg.mxu0
    %v660 = vunpack.c.l.b16 %v562
    %v661 = vunpack.c.l.b16 %v563
    %v662 = vunpack.c.l.b16 %v564
    %v663 = vunpack.c.l.b16 %v565
    %v664 = vpack.c.b16 %v661, %v660
    %v665 = vpack.c.b16 %v663, %v662
    %668 = vmatprep.subr.bf16.mxu0 0
    %669 = vmatpush1.bf16.msra.mxu0 0
    %670 = vmatprep.subr.bf16.mxu0 0
    %671 = vmatpush1.bf16.msra.mxu0 0
    %672 = vmatprep.subr.bf16.mxu0 0
    %673 = vmatpush1.bf16.msra.mxu0 0
    %674 = vmatprep.subr.bf16.mxu0 0
    %675 = vmatpush1.bf16.msra.mxu0 0
    %676 = vmatprep.subr.bf16.mxu0 0
    %677 = vmatpush1.bf16.msra.mxu0 0
    %678 = vmatprep.subr.bf16.mxu0 0
    %679 = vmatpush1.bf16.msra.mxu0 0
    %680 = vmatprep.subr.bf16.mxu0 0
    %681 = vmatpush1.bf16.msra.mxu0 %v665
    %682 = vmatprep.subr.bf16.mxu0 0
    %683 = vmatpush1.bf16.msra.mxu0 %v664
    %684 = vmatprep.subr.bf16.mxu0 0
    %685 = vmatpush2.bf16.msra.mxu0 0
    %686 = vmatprep.subr.bf16.mxu0 0
    %687 = vmatpush2.bf16.msra.mxu0 0
    %688 = vmatprep.subr.bf16.mxu0 0
    %689 = vmatpush2.bf16.msra.mxu0 0
    %690 = vmatprep.subr.bf16.mxu0 0
    %691 = vmatpush2.bf16.msra.mxu0 0
    %692 = vmatprep.subr.bf16.mxu0 0
    %693 = vmatpush2.bf16.msra.mxu0 0
    %694 = vmatprep.subr.bf16.mxu0 0
    %695 = vmatpush2.bf16.msra.mxu0 0
    %696 = vmatprep.subr.bf16.mxu0 0
    %697 = vmatpush2.bf16.msra.mxu0 0
    %698 = vmatprep.subr.bf16.mxu0 0
    %699 = vmatpush2.bf16.msra.mxu0 0
    %700 = vmatprep.mubr.bf16.mxu0 0
    %701 = vmatmul.mubr.bf16.gmra.mxu0 %v614
    %v702 = vpop.f32.mrf.mxu0
    %v703 = vadd.f32 0.0, %v702
    %v704 = vpop.f32.mrf.mxu0
    %v705 = vpop.f32.mrf.mxu0
    %v706 = vpop.f32.mrf.mxu0
    %707 = vdwg.mxu0
    %v708 = vadd.f32 %v363, %v651
    %v709 = vxor.u32 %v708, 2147483648
    %v710 = vmul.f32 %v709, 1.442695
    %v711 = vpow.pop %v710
    %v712 = vadd.f32 %v711, 1.0
    %v713 = vrcp.pop %v712
    %v714 = vmul.f32 1.0, %v713
    %716 = vrot.lane.b32.xlu0 %v703, 32
    %v717 = vpop.permute.xlu0 %716
    %v719 = vadd.f32 %v363, %v717
    %v720 = vxor.u32 %v719, 2147483648
    %v721 = vmul.f32 %v720, 1.442695
    %v722 = vpow.pop %v721
    %v723 = vadd.f32 %v722, 1.0
    %v724 = vrcp.pop %v723
    %v725 = vmul.f32 1.0, %v724
    %v730 = vunpack.c.l.b16 %v566
    %v731 = vunpack.c.l.b16 %v567
    %v732 = vunpack.c.l.b16 %v568
    %v733 = vunpack.c.l.b16 %v569
    %v734 = vpack.c.b16 %v731, %v730
    %v735 = vpack.c.b16 %v733, %v732
    %738 = vmatprep.subr.bf16.mxu0 0
    %739 = vmatpush1.bf16.msra.mxu0 0
    %740 = vmatprep.subr.bf16.mxu0 0
    %741 = vmatpush1.bf16.msra.mxu0 0
    %742 = vmatprep.subr.bf16.mxu0 0
    %743 = vmatpush1.bf16.msra.mxu0 0
    %744 = vmatprep.subr.bf16.mxu0 0
    %745 = vmatpush1.bf16.msra.mxu0 0
    %746 = vmatprep.subr.bf16.mxu0 0
    %747 = vmatpush1.bf16.msra.mxu0 0
    %748 = vmatprep.subr.bf16.mxu0 0
    %749 = vmatpush1.bf16.msra.mxu0 0
    %750 = vmatprep.subr.bf16.mxu0 0
    %751 = vmatpush1.bf16.msra.mxu0 %v735
    %752 = vmatprep.subr.bf16.mxu0 0
    %753 = vmatpush1.bf16.msra.mxu0 %v734
    %754 = vmatprep.subr.bf16.mxu0 0
    %755 = vmatpush2.bf16.msra.mxu0 0
    %756 = vmatprep.subr.bf16.mxu0 0
    %757 = vmatpush2.bf16.msra.mxu0 0
    %758 = vmatprep.subr.bf16.mxu0 0
    %759 = vmatpush2.bf16.msra.mxu0 0
    %760 = vmatprep.subr.bf16.mxu0 0
    %761 = vmatpush2.bf16.msra.mxu0 0
    %762 = vmatprep.subr.bf16.mxu0 0
    %763 = vmatpush2.bf16.msra.mxu0 0
    %764 = vmatprep.subr.bf16.mxu0 0
    %765 = vmatpush2.bf16.msra.mxu0 0
    %766 = vmatprep.subr.bf16.mxu0 0
    %767 = vmatpush2.bf16.msra.mxu0 0
    %768 = vmatprep.subr.bf16.mxu0 0
    %769 = vmatpush2.bf16.msra.mxu0 0
    %770 = vmatprep.mubr.bf16.mxu0 0
    %771 = vmatmul.mubr.bf16.gmra.mxu0 %v614
    %v772 = vpop.f32.mrf.mxu0
    %v773 = vadd.f32 %v575, %v772
    %v774 = vpop.f32.mrf.mxu0
    %v775 = vpop.f32.mrf.mxu0
    %v776 = vpop.f32.mrf.mxu0
    %777 = vdwg.mxu0
    %v778 = vmul.f32 %v714, %v773
    %780 = vrot.lane.b32.xlu0 %v778, 64
    %v781 = vpop.permute.xlu0 %780
    %v783 = vadd.f32 %v363, %v781
    %v784 = vtanh.pop %v783
    %v785 = vsub.f32 1.0, %v725
    %787 = vrot.lane.b32.xlu0 %v784, 96
    %v788 = vpop.permute.xlu0 %787
    %v790 = vmul.f32 %v785, %v788
    %v791 = vmul.f32 %v725, %v595
    %v792 = vadd.f32 %v790, %v791
    %v793 = vpack.c.bf16 %v792, %v792
    %795 = vrot.lane.b32.xlu0 %v793, 96
    %v796 = vpop.permute.xlu0 %795
    %v798 = vsel %vm612, %v796, 0
    %800 = vmatprep.subr.bf16.mxu0 0
    %801 = vmatpush1.bf16.msra.mxu0 0
    %802 = vmatprep.subr.bf16.mxu0 0
    %803 = vmatpush1.bf16.msra.mxu0 0
    %804 = vmatprep.subr.bf16.mxu0 0
    %805 = vmatpush1.bf16.msra.mxu0 0
    %806 = vmatprep.subr.bf16.mxu0 0
    %807 = vmatpush1.bf16.msra.mxu0 0
    %808 = vmatprep.subr.bf16.mxu0 0
    %809 = vmatpush1.bf16.msra.mxu0 0
    %810 = vmatprep.subr.bf16.mxu0 0
    %811 = vmatpush1.bf16.msra.mxu0 0
    %812 = vmatprep.subr.bf16.mxu0 0
    %813 = vmatpush1.bf16.msra.mxu0 %v609
    %814 = vmatprep.subr.bf16.mxu0 0
    %815 = vmatpush1.bf16.msra.mxu0 %v608
    %816 = vmatprep.subr.bf16.mxu0 0
    %817 = vmatpush2.bf16.msra.mxu0 0
    %818 = vmatprep.subr.bf16.mxu0 0
    %819 = vmatpush2.bf16.msra.mxu0 0
    %820 = vmatprep.subr.bf16.mxu0 0
    %821 = vmatpush2.bf16.msra.mxu0 0
    %822 = vmatprep.subr.bf16.mxu0 0
    %823 = vmatpush2.bf16.msra.mxu0 0
    %824 = vmatprep.subr.bf16.mxu0 0
    %825 = vmatpush2.bf16.msra.mxu0 0
    %826 = vmatprep.subr.bf16.mxu0 0
    %827 = vmatpush2.bf16.msra.mxu0 0
    %828 = vmatprep.subr.bf16.mxu0 0
    %829 = vmatpush2.bf16.msra.mxu0 0
    %830 = vmatprep.subr.bf16.mxu0 0
    %831 = vmatpush2.bf16.msra.mxu0 0
    %832 = vmatprep.mubr.bf16.mxu0 0
    %833 = vmatmul.mubr.bf16.gmra.mxu0 %v798
    %v834 = vpop.f32.mrf.mxu0
    %v835 = vadd.f32 0.0, %v834
    %v836 = vpop.f32.mrf.mxu0
    %v837 = vpop.f32.mrf.mxu0
    %v838 = vpop.f32.mrf.mxu0
    %839 = vdwg.mxu0
    %840 = vmatprep.subr.bf16.mxu0 0
    %841 = vmatpush1.bf16.msra.mxu0 0
    %842 = vmatprep.subr.bf16.mxu0 0
    %843 = vmatpush1.bf16.msra.mxu0 0
    %844 = vmatprep.subr.bf16.mxu0 0
    %845 = vmatpush1.bf16.msra.mxu0 0
    %846 = vmatprep.subr.bf16.mxu0 0
    %847 = vmatpush1.bf16.msra.mxu0 0
    %848 = vmatprep.subr.bf16.mxu0 0
    %849 = vmatpush1.bf16.msra.mxu0 0
    %850 = vmatprep.subr.bf16.mxu0 0
    %851 = vmatpush1.bf16.msra.mxu0 0
    %852 = vmatprep.subr.bf16.mxu0 0
    %853 = vmatpush1.bf16.msra.mxu0 %v665
    %854 = vmatprep.subr.bf16.mxu0 0
    %855 = vmatpush1.bf16.msra.mxu0 %v664
    %856 = vmatprep.subr.bf16.mxu0 0
    %857 = vmatpush2.bf16.msra.mxu0 0
    %858 = vmatprep.subr.bf16.mxu0 0
    %859 = vmatpush2.bf16.msra.mxu0 0
    %860 = vmatprep.subr.bf16.mxu0 0
    %861 = vmatpush2.bf16.msra.mxu0 0
    %862 = vmatprep.subr.bf16.mxu0 0
    %863 = vmatpush2.bf16.msra.mxu0 0
    %864 = vmatprep.subr.bf16.mxu0 0
    %865 = vmatpush2.bf16.msra.mxu0 0
    %866 = vmatprep.subr.bf16.mxu0 0
    %867 = vmatpush2.bf16.msra.mxu0 0
    %868 = vmatprep.subr.bf16.mxu0 0
    %869 = vmatpush2.bf16.msra.mxu0 0
    %870 = vmatprep.subr.bf16.mxu0 0
    %871 = vmatpush2.bf16.msra.mxu0 0
    %872 = vmatprep.mubr.bf16.mxu0 0
    %873 = vmatmul.mubr.bf16.gmra.mxu0 %v798
    %v874 = vpop.f32.mrf.mxu0
    %v875 = vadd.f32 0.0, %v874
    %v876 = vpop.f32.mrf.mxu0
    %v877 = vpop.f32.mrf.mxu0
    %v878 = vpop.f32.mrf.mxu0
    %879 = vdwg.mxu0
    %v880 = vadd.f32 %v460, %v835
    %v881 = vxor.u32 %v880, 2147483648
    %v882 = vmul.f32 %v881, 1.442695
    %v883 = vpow.pop %v882
    %v884 = vadd.f32 %v883, 1.0
    %v885 = vrcp.pop %v884
    %v886 = vmul.f32 1.0, %v885
    %888 = vrot.lane.b32.xlu0 %v875, 32
    %v889 = vpop.permute.xlu0 %888
    %v891 = vadd.f32 %v460, %v889
    %v892 = vxor.u32 %v891, 2147483648
    %v893 = vmul.f32 %v892, 1.442695
    %v894 = vpow.pop %v893
    %v895 = vadd.f32 %v894, 1.0
    %v896 = vrcp.pop %v895
    %v897 = vmul.f32 1.0, %v896
    %898 = vmatprep.subr.bf16.mxu0 0
    %899 = vmatpush1.bf16.msra.mxu0 0
    %900 = vmatprep.subr.bf16.mxu0 0
    %901 = vmatpush1.bf16.msra.mxu0 0
    %902 = vmatprep.subr.bf16.mxu0 0
    %903 = vmatpush1.bf16.msra.mxu0 0
    %904 = vmatprep.subr.bf16.mxu0 0
    %905 = vmatpush1.bf16.msra.mxu0 0
    %906 = vmatprep.subr.bf16.mxu0 0
    %907 = vmatpush1.bf16.msra.mxu0 0
    %908 = vmatprep.subr.bf16.mxu0 0
    %909 = vmatpush1.bf16.msra.mxu0 0
    %910 = vmatprep.subr.bf16.mxu0 0
    %911 = vmatpush1.bf16.msra.mxu0 %v735
    %912 = vmatprep.subr.bf16.mxu0 0
    %913 = vmatpush1.bf16.msra.mxu0 %v734
    %914 = vmatprep.subr.bf16.mxu0 0
    %915 = vmatpush2.bf16.msra.mxu0 0
    %916 = vmatprep.subr.bf16.mxu0 0
    %917 = vmatpush2.bf16.msra.mxu0 0
    %918 = vmatprep.subr.bf16.mxu0 0
    %919 = vmatpush2.bf16.msra.mxu0 0
    %920 = vmatprep.subr.bf16.mxu0 0
    %921 = vmatpush2.bf16.msra.mxu0 0
    %922 = vmatprep.subr.bf16.mxu0 0
    %923 = vmatpush2.bf16.msra.mxu0 0
    %924 = vmatprep.subr.bf16.mxu0 0
    %925 = vmatpush2.bf16.msra.mxu0 0
    %926 = vmatprep.subr.bf16.mxu0 0
    %927 = vmatpush2.bf16.msra.mxu0 0
    %928 = vmatprep.subr.bf16.mxu0 0
    %929 = vmatpush2.bf16.msra.mxu0 0
    %930 = vmatprep.mubr.bf16.mxu0 0
    %931 = vmatmul.mubr.bf16.gmra.mxu0 %v798
    %v932 = vpop.f32.mrf.mxu0
    %v933 = vadd.f32 %v575, %v932
    %v934 = vpop.f32.mrf.mxu0
    %v935 = vpop.f32.mrf.mxu0
    %v936 = vpop.f32.mrf.mxu0
    %937 = vdwg.mxu0
    %v938 = vmul.f32 %v886, %v933
    %940 = vrot.lane.b32.xlu0 %v938, 64
    %v941 = vpop.permute.xlu0 %940
    %v943 = vadd.f32 %v460, %v941
    %v944 = vtanh.pop %v943
    %v945 = vsub.f32 1.0, %v897
    %947 = vrot.lane.b32.xlu0 %v944, 96
    %v948 = vpop.permute.xlu0 %947
    %v950 = vmul.f32 %v945, %v948
    %v951 = vmul.f32 %v897, %v792
    %v952 = vadd.f32 %v950, %v951
    %v953 = vpack.c.bf16 %v952, %v952
    %955 = vrot.lane.b32.xlu0 %v953, 96
    %v956 = vpop.permute.xlu0 %955
    %v958 = vsel %vm612, %v956, 0
    %960 = vmatprep.subr.bf16.mxu0 0
    %961 = vmatpush1.bf16.msra.mxu0 0
    %962 = vmatprep.subr.bf16.mxu0 0
    %963 = vmatpush1.bf16.msra.mxu0 0
    %964 = vmatprep.subr.bf16.mxu0 0
    %965 = vmatpush1.bf16.msra.mxu0 0
    %966 = vmatprep.subr.bf16.mxu0 0
    %967 = vmatpush1.bf16.msra.mxu0 0
    %968 = vmatprep.subr.bf16.mxu0 0
    %969 = vmatpush1.bf16.msra.mxu0 0
    %970 = vmatprep.subr.bf16.mxu0 0
    %971 = vmatpush1.bf16.msra.mxu0 0
    %972 = vmatprep.subr.bf16.mxu0 0
    %973 = vmatpush1.bf16.msra.mxu0 %v609
    %974 = vmatprep.subr.bf16.mxu0 0
    %975 = vmatpush1.bf16.msra.mxu0 %v608
    %976 = vmatprep.subr.bf16.mxu0 0
    %977 = vmatpush2.bf16.msra.mxu0 0
    %978 = vmatprep.subr.bf16.mxu0 0
    %979 = vmatpush2.bf16.msra.mxu0 0
    %980 = vmatprep.subr.bf16.mxu0 0
    %981 = vmatpush2.bf16.msra.mxu0 0
    %982 = vmatprep.subr.bf16.mxu0 0
    %983 = vmatpush2.bf16.msra.mxu0 0
    %984 = vmatprep.subr.bf16.mxu0 0
    %985 = vmatpush2.bf16.msra.mxu0 0
    %986 = vmatprep.subr.bf16.mxu0 0
    %987 = vmatpush2.bf16.msra.mxu0 0
    %988 = vmatprep.subr.bf16.mxu0 0
    %989 = vmatpush2.bf16.msra.mxu0 0
    %990 = vmatprep.subr.bf16.mxu0 0
    %991 = vmatpush2.bf16.msra.mxu0 0
    %992 = vmatprep.mubr.bf16.mxu0 0
    %993 = vmatmul.mubr.bf16.gmra.mxu0 %v958
    %v994 = vpop.f32.mrf.mxu0
    %v995 = vadd.f32 0.0, %v994
    %v996 = vpop.f32.mrf.mxu0
    %v997 = vpop.f32.mrf.mxu0
    %v998 = vpop.f32.mrf.mxu0
    %999 = vdwg.mxu0
    %1000 = vmatprep.subr.bf16.mxu0 0
    %1001 = vmatpush1.bf16.msra.mxu0 0
    %1002 = vmatprep.subr.bf16.mxu0 0
    %1003 = vmatpush1.bf16.msra.mxu0 0
    %1004 = vmatprep.subr.bf16.mxu0 0
    %1005 = vmatpush1.bf16.msra.mxu0 0
    %1006 = vmatprep.subr.bf16.mxu0 0
    %1007 = vmatpush1.bf16.msra.mxu0 0
    %1008 = vmatprep.subr.bf16.mxu0 0
    %1009 = vmatpush1.bf16.msra.mxu0 0
    %1010 = vmatprep.subr.bf16.mxu0 0
    %1011 = vmatpush1.bf16.msra.mxu0 0
    %1012 = vmatprep.subr.bf16.mxu0 0
    %1013 = vmatpush1.bf16.msra.mxu0 %v665
    %1014 = vmatprep.subr.bf16.mxu0 0
    %1015 = vmatpush1.bf16.msra.mxu0 %v664
    %1016 = vmatprep.subr.bf16.mxu0 0
    %1017 = vmatpush2.bf16.msra.mxu0 0
    %1018 = vmatprep.subr.bf16.mxu0 0
    %1019 = vmatpush2.bf16.msra.mxu0 0
    %1020 = vmatprep.subr.bf16.mxu0 0
    %1021 = vmatpush2.bf16.msra.mxu0 0
    %1022 = vmatprep.subr.bf16.mxu0 0
    %1023 = vmatpush2.bf16.msra.mxu0 0
    %1024 = vmatprep.subr.bf16.mxu0 0
    %1025 = vmatpush2.bf16.msra.mxu0 0
    %1026 = vmatprep.subr.bf16.mxu0 0
    %1027 = vmatpush2.bf16.msra.mxu0 0
    %1028 = vmatprep.subr.bf16.mxu0 0
    %1029 = vmatpush2.bf16.msra.mxu0 0
    %1030 = vmatprep.subr.bf16.mxu0 0
    %1031 = vmatpush2.bf16.msra.mxu0 0
    %1032 = vmatprep.mubr.bf16.mxu0 0
    %1033 = vmatmul.mubr.bf16.gmra.mxu0 %v958
    %v1034 = vpop.f32.mrf.mxu0
    %v1035 = vadd.f32 0.0, %v1034
    %v1036 = vpop.f32.mrf.mxu0
    %v1037 = vpop.f32.mrf.mxu0
    %v1038 = vpop.f32.mrf.mxu0
    %1039 = vdwg.mxu0
    %v1040 = vadd.f32 %v557, %v995
    %v1041 = vxor.u32 %v1040, 2147483648
    %v1042 = vmul.f32 %v1041, 1.442695
    %v1043 = vpow.pop %v1042
    %v1044 = vadd.f32 %v1043, 1.0
    %v1045 = vrcp.pop %v1044
    %v1046 = vmul.f32 1.0, %v1045
    %1048 = vrot.lane.b32.xlu0 %v1035, 32
    %v1049 = vpop.permute.xlu0 %1048
    %v1051 = vadd.f32 %v557, %v1049
    %v1052 = vxor.u32 %v1051, 2147483648
    %v1053 = vmul.f32 %v1052, 1.442695
    %v1054 = vpow.pop %v1053
    %v1055 = vadd.f32 %v1054, 1.0
    %v1056 = vrcp.pop %v1055
    %v1057 = vmul.f32 1.0, %v1056
    %1058 = vmatprep.subr.bf16.mxu0 0
    %1059 = vmatpush1.bf16.msra.mxu0 0
    %1060 = vmatprep.subr.bf16.mxu0 0
    %1061 = vmatpush1.bf16.msra.mxu0 0
    %1062 = vmatprep.subr.bf16.mxu0 0
    %1063 = vmatpush1.bf16.msra.mxu0 0
    %1064 = vmatprep.subr.bf16.mxu0 0
    %1065 = vmatpush1.bf16.msra.mxu0 0
    %1066 = vmatprep.subr.bf16.mxu0 0
    %1067 = vmatpush1.bf16.msra.mxu0 0
    %1068 = vmatprep.subr.bf16.mxu0 0
    %1069 = vmatpush1.bf16.msra.mxu0 0
    %1070 = vmatprep.subr.bf16.mxu0 0
    %1071 = vmatpush1.bf16.msra.mxu0 %v735
    %1072 = vmatprep.subr.bf16.mxu0 0
    %1073 = vmatpush1.bf16.msra.mxu0 %v734
    %1074 = vmatprep.subr.bf16.mxu0 0
    %1075 = vmatpush2.bf16.msra.mxu0 0
    %1076 = vmatprep.subr.bf16.mxu0 0
    %1077 = vmatpush2.bf16.msra.mxu0 0
    %1078 = vmatprep.subr.bf16.mxu0 0
    %1079 = vmatpush2.bf16.msra.mxu0 0
    %1080 = vmatprep.subr.bf16.mxu0 0
    %1081 = vmatpush2.bf16.msra.mxu0 0
    %1082 = vmatprep.subr.bf16.mxu0 0
    %1083 = vmatpush2.bf16.msra.mxu0 0
    %1084 = vmatprep.subr.bf16.mxu0 0
    %1085 = vmatpush2.bf16.msra.mxu0 0
    %1086 = vmatprep.subr.bf16.mxu0 0
    %1087 = vmatpush2.bf16.msra.mxu0 0
    %1088 = vmatprep.subr.bf16.mxu0 0
    %1089 = vmatpush2.bf16.msra.mxu0 0
    %1090 = vmatprep.mubr.bf16.mxu0 0
    %1091 = vmatmul.mubr.bf16.gmra.mxu0 %v958
    %v1092 = vpop.f32.mrf.mxu0
    %v1093 = vadd.f32 %v575, %v1092
    %v1094 = vpop.f32.mrf.mxu0
    %v1095 = vpop.f32.mrf.mxu0
    %v1096 = vpop.f32.mrf.mxu0
    %1097 = vdwg.mxu0
    %v1098 = vmul.f32 %v1046, %v1093
    %1100 = vrot.lane.b32.xlu0 %v1098, 64
    %v1101 = vpop.permute.xlu0 %1100
    %v1103 = vadd.f32 %v557, %v1101
    %v1104 = vtanh.pop %v1103
    %v1105 = vsub.f32 1.0, %v1057
    %1107 = vrot.lane.b32.xlu0 %v1104, 96
    %v1108 = vpop.permute.xlu0 %1107
    %v1110 = vmul.f32 %v1105, %v1108
    %v1111 = vmul.f32 %v1057, %v952
    %v1112 = vadd.f32 %v1110, %v1111
    %1114 = vrot.lane.b32.xlu0 %v1112, 96
    %v1115 = vpop.permute.xlu0 %1114
    %1117 = vst.msk [vmem:[#allocation14] sm:$0xff] %vm612, %v1115
    // Predicated region
    $region74: #{tpu_custom_call.1} parent=1 // pred_check
      _
    $region75: #{tpu_custom_call.1} parent=1 // pred_check_branch
      %1119 = sbr.rel (0) target = $region77
    $region76: #{tpu_custom_call.1} parent=1 // pred_region
      %s1121 = ssub.s32 128, 128
      %1122 = vsyncadd [#allocation4], %s1121
      %s1124 = sshll.u32 [#allocation14], 4
      %s1125 = int_to_ptr.vmem [resolvable:$true] %s1124
      %1127 = dma.vmem_to_hbm [thread:$0]  %s1125, 128, %s11, [#allocation4]
    $region77: #{tpu_custom_call.1} parent=1 // pred_fallthru
      _
    // Predicated region
    $region78: #{tpu_custom_call.1} parent=1 // pred_check
      _
    $region79: #{tpu_custom_call.1} parent=1 // pred_check_branch
      %1129 = sbr.rel (0) target = $region81
    $region80: #{tpu_custom_call.1} parent=1 // pred_region
      %1130 = dma.done [#allocation4], 128
    $region81: #{tpu_custom_call.1} parent=1 // pred_fallthru
      _
    %1131 = vsyncpa [#allocation3], 1
    %1132 = vsyncpa [#allocation6], 1
    %1133 = vsyncpa [#allocation9], 1
    %1134 = vsyncpa [#allocation12], 1
    %1135 = vsyncpa [#allocation4], 1

</llo_original>
